<compile_context>
chip_gen: v7x
topology: tpu7x:2x2x1
jax: 0.10.0
libtpu: 0.0.40
codegen_flags: <defaults>
</compile_context>

<pallas_src>
import functools

import jax
import jax.numpy as jnp
from jax import lax
from jax.experimental import pallas as pl
from jax.experimental.pallas import tpu as pltpu


def _attn_kernel(x_ref, wqT_ref, wkT_ref, wvT_ref, wpT_ref, bp_ref,
                 o_ref, q_ref, k_ref, v_ref, ctx_ref, *,
                 scale, num_heads, head_dim, batch_block, seq_len,
                 compute_dtype):
    """One grid step = one block of `batch_block` batch elements.

    x_ref   : (rows, C)  tokens (rows = batch_block * N), compute_dtype
    wqT_ref : (C, C)     Wq^T     (q = x @ Wq^T), compute_dtype, VMEM-resident
    wkT_ref : (C, C)     Wk^T
    wvT_ref : (C, C)     Wv^T
    wpT_ref : (C, C)     Wproj^T
    bp_ref  : (1, C)     proj bias (f32)
    o_ref   : (rows, C)  output block
    q_ref, k_ref, v_ref, ctx_ref : (rows, C) compute_dtype VMEM scratch
    """
    x2 = x_ref[...]                                                # (rows, C)

    # Full-width projections on the tall slab, once per step (not per head).
    # Softmax scale folded into q here (one (rows, C) multiply).
    q_ref[...] = (jnp.dot(x2, wqT_ref[...],
                          preferred_element_type=jnp.float32)
                  * scale).astype(compute_dtype)
    k_ref[...] = jnp.dot(x2, wkT_ref[...],
                         preferred_element_type=jnp.float32).astype(compute_dtype)
    v_ref[...] = jnp.dot(x2, wvT_ref[...],
                         preferred_element_type=jnp.float32).astype(compute_dtype)

    # Per-(head, batch) attention; static Python loops (small, static counts)
    # with all operands round-tripped through VMEM scratch so each iteration's
    # live set is one head's (N, dh) slices plus one (N, N) f32 score tile.
    for h in range(num_heads):
        lo = h * head_dim
        for b in range(batch_block):
            r0 = b * seq_len
            qh = q_ref[r0:r0 + seq_len, lo:lo + head_dim]          # (N, dh)
            kh = k_ref[r0:r0 + seq_len, lo:lo + head_dim]
            vh = v_ref[r0:r0 + seq_len, lo:lo + head_dim]

            # NT-form dot: contract head_dim directly, no in-kernel .T.
            s = lax.dot_general(qh, kh, (((1,), (1,)), ((), ())),
                                preferred_element_type=jnp.float32)  # (N, N)

            # Softmax with deferred normalization (exp / max-sub stay f32).
            s = s - jnp.max(s, axis=-1, keepdims=True)
            p = jnp.exp(s)                                          # (N, N) f32
            denom = jnp.sum(p, axis=-1, keepdims=True)              # (N, 1) f32

            ctx_h = jnp.dot(p.astype(compute_dtype), vh,
                            preferred_element_type=jnp.float32)     # (N, dh) f32
            ctx_h = ctx_h * pl.reciprocal(denom, approx=True)       # EUP slot
            ctx_ref[r0:r0 + seq_len, lo:lo + head_dim] = ctx_h.astype(compute_dtype)

    # ONE full-depth output projection + bias; single store of the out block.
    out = jnp.dot(ctx_ref[...], wpT_ref[...],
                  preferred_element_type=jnp.float32) + bp_ref[...]
    o_ref[...] = out.astype(o_ref.dtype)


def efficient_attention(x, wq, wkv, wproj, bproj, *, num_heads,
                        compute_dtype=jnp.float32, batch_block=None):
    """x: (B, N, C).  wq: (C, C), wkv: (2C, C), wproj: (C, C), bproj: (C,).

    compute_dtype: dtype of the MXU operands (jnp.bfloat16 recommended on
    v6e/v7x for ~2x matmul throughput and half the weight DMA; softmax and
    accumulation always stay f32). Default f32 matches the PyTorch module.
    """
    B, N, C = x.shape
    assert C % num_heads == 0
    dh = C // num_heads
    scale = dh ** (-0.5)
    out_dtype = x.dtype
    cdt = compute_dtype

    # Batch blocking: toy sizes collapse to a single grid step over the whole
    # (B*N, C) slab; larger problems tile the batch axis (parallel across TCs).
    if batch_block is None:
        batch_block = B if (B * N * C * 4) <= (2 << 20) else 1
    assert B % batch_block == 0, "batch_block must divide B"
    if batch_block < B:
        assert (batch_block * N) % 8 == 0, \
            "batch_block * N must be a multiple of 8 when tiling the batch axis"
    rows = batch_block * N
    grid = (B // batch_block,)

    # Glue (host/XLA side): split kv, pre-transpose every weight so the kernel
    # only does plain NN matmuls, and pre-cast weights + x to compute_dtype so
    # the kernel never re-casts VMEM-resident operands.
    x2d = x.reshape(B * N, C).astype(cdt)
    wqT = wq.T.astype(cdt)                 # (C, C)
    wkT = wkv[:C, :].T.astype(cdt)         # (C, C)
    wvT = wkv[C:, :].T.astype(cdt)         # (C, C)
    wpT = wproj.T.astype(cdt)              # (C, C)
    bp = bproj.reshape(1, C).astype(jnp.float32)

    # Explicit VMEM budget sized from the real tiles (+ headroom).
    # TODO(synk): re-derive against the 64 MiB physical VMEM on v7x for
    #             production shapes (smaller batch_block / flash tiling).
    w_bytes = jnp.dtype(cdt).itemsize
    needed = (
        2 * rows * C * (w_bytes + jnp.dtype(out_dtype).itemsize)  # x/out, dbl-buffered
        + 2 * 4 * C * C * w_bytes                                 # resident weights
        + 2 * C * 4                                               # bias
        + 4 * rows * C * w_bytes                                  # q/k/v/ctx scratch
        + N * N * 4                                               # live score tile
    )
    vmem_limit = int(min(max(2 * needed + (4 << 20), 16 << 20), 96 << 20))

    kernel = functools.partial(
        _attn_kernel, scale=scale, num_heads=num_heads, head_dim=dh,
        batch_block=batch_block, seq_len=N, compute_dtype=cdt)

    out2d = pl.pallas_call(
        kernel,
        out_shape=jax.ShapeDtypeStruct((B * N, C), out_dtype),
        grid_spec=pltpu.PrefetchScalarGridSpec(
            num_scalar_prefetch=0,
            grid=grid,
            in_specs=[
                pl.BlockSpec((rows, C), lambda i: (i, 0)),   # x slab (per block)
                pl.BlockSpec((C, C), lambda i: (0, 0)),      # Wq^T    (resident)
                pl.BlockSpec((C, C), lambda i: (0, 0)),      # Wk^T    (resident)
                pl.BlockSpec((C, C), lambda i: (0, 0)),      # Wv^T    (resident)
                pl.BlockSpec((C, C), lambda i: (0, 0)),      # Wproj^T (resident)
                pl.BlockSpec((1, C), lambda i: (0, 0)),      # proj bias
            ],
            out_specs=pl.BlockSpec((rows, C), lambda i: (i, 0)),
            scratch_shapes=[
                pltpu.VMEM((rows, C), cdt),    # q
                pltpu.VMEM((rows, C), cdt),    # k
                pltpu.VMEM((rows, C), cdt),    # v
                pltpu.VMEM((rows, C), cdt),    # ctx
            ],
        ),
        compiler_params=pltpu.CompilerParams(
            dimension_semantics=("parallel",),   # batch blocks shard across TCs
            vmem_limit_bytes=vmem_limit,
        ),
    )(x2d, wqT, wkT, wvT, wpT, bp)
    return out2d.reshape(B, N, C)


def efficient_attention_ref(x, wq, wkv, wproj, bproj, *, num_heads):
    """Pure-JAX reference mirroring the PyTorch forward (sr_ratio=1)."""
    B, N, C = x.shape
    dh = C // num_heads
    scale = dh ** (-0.5)
    q = (x @ wq.T).reshape(B, N, num_heads, dh).transpose(0, 2, 1, 3)
    kv = (x @ wkv.T).reshape(B, N, 2, num_heads, dh).transpose(2, 0, 3, 1, 4)
    k, v = kv[0], kv[1]
    attn = jax.nn.softmax((q @ k.transpose(0, 1, 3, 2)) * scale, axis=-1)
    out = (attn @ v).transpose(0, 2, 1, 3).reshape(B, N, C)
    return out @ wproj.T + bproj


if __name__ == "__main__":
    # Small config consistent with the module: dim=32, num_heads=4 (head_dim=8),
    # H=W=4 -> N=16, batch=2, sr_ratio=1, qkv_bias=False.
    B, H, W, C = 2, 4, 4, 32
    num_heads = 4
    N = H * W

    key = jax.random.PRNGKey(0)
    kx, kq, kkv, kp, kb = jax.random.split(key, 5)
    x = jax.random.normal(kx, (B, N, C), dtype=jnp.float32)
    wq = 0.02 * jax.random.normal(kq, (C, C), dtype=jnp.float32)
    wkv = 0.02 * jax.random.normal(kkv, (2 * C, C), dtype=jnp.float32)
    wproj = 0.02 * jax.random.normal(kp, (C, C), dtype=jnp.float32)
    bproj = 0.02 * jax.random.normal(kb, (C,), dtype=jnp.float32)

    ref = efficient_attention_ref(x, wq, wkv, wproj, bproj, num_heads=num_heads)

    # f32 path: matches the PyTorch module semantics (approx reciprocal only).
    out = efficient_attention(x, wq, wkv, wproj, bproj, num_heads=num_heads,
                              compute_dtype=jnp.float32)
    out = jax.block_until_ready(out)
    if not jnp.allclose(out, ref, atol=2e-3, rtol=2e-3):
        raise AssertionError("Pallas kernel (f32) does not match JAX reference")

    # bf16 MXU-operand path (the v6e/v7x recommendation); loose sanity check.
    out_bf16 = efficient_attention(x, wq, wkv, wproj, bproj,
                                   num_heads=num_heads,
                                   compute_dtype=jnp.bfloat16)
    out_bf16 = jax.block_until_ready(out_bf16)
    if not bool(jnp.all(jnp.isfinite(out_bf16))):
        raise AssertionError("Pallas kernel (bf16 operands) produced non-finite values")
    if float(jnp.max(jnp.abs(out_bf16 - ref))) > 0.1:
        raise AssertionError("Pallas kernel (bf16 operands) deviates too far from reference")

    print("KERNEL_OK")
</pallas_src>

<mosaic_0001>
module attributes {stable_mosaic.version = 11 : i64} {
  func.func @_attn_kernel(%arg0: i32, %arg1: memref<32x32xf32, #tpu.memory_space<vmem>>, %arg2: memref<32x32xf32, #tpu.memory_space<vmem>>, %arg3: memref<32x32xf32, #tpu.memory_space<vmem>>, %arg4: memref<32x32xf32, #tpu.memory_space<vmem>>, %arg5: memref<32x32xf32, #tpu.memory_space<vmem>>, %arg6: memref<1x32xf32, #tpu.memory_space<vmem>>, %arg7: memref<32x32xf32, #tpu.memory_space<vmem>>, %arg8: memref<32x32xf32, #tpu.memory_space<vmem>>, %arg9: memref<32x32xf32, #tpu.memory_space<vmem>>, %arg10: memref<32x32xf32, #tpu.memory_space<vmem>>, %arg11: memref<32x32xf32, #tpu.memory_space<vmem>>) attributes {dimension_semantics = [#tpu.dimension_semantics<parallel>], iteration_bounds = array<i64: 1>, scalar_prefetch = 0 : i64, scratch_operands = 4 : i64, tpu.core_type = #tpu.core_type<tc>, window_params = [{transform_indices = @transform_0, window_bounds = array<i64: 32, 32>}, {pipeline_mode = #tpu.pipeline_mode<synchronous>, transform_indices = @transform_1, window_bounds = array<i64: 32, 32>}, {pipeline_mode = #tpu.pipeline_mode<synchronous>, transform_indices = @transform_2, window_bounds = array<i64: 32, 32>}, {pipeline_mode = #tpu.pipeline_mode<synchronous>, transform_indices = @transform_3, window_bounds = array<i64: 32, 32>}, {pipeline_mode = #tpu.pipeline_mode<synchronous>, transform_indices = @transform_4, window_bounds = array<i64: 32, 32>}, {pipeline_mode = #tpu.pipeline_mode<synchronous>, transform_indices = @transform_5, window_bounds = array<i64: 1, 32>}, {transform_indices = @transform_6, window_bounds = array<i64: 32, 32>}]} {
    %c0 = arith.constant 0 : index
    %c0_0 = arith.constant 0 : index
    %0 = vector.load %arg1[%c0, %c0_0] : memref<32x32xf32, #tpu.memory_space<vmem>>, vector<32x32xf32>
    %c0_1 = arith.constant 0 : index
    %c0_2 = arith.constant 0 : index
    %1 = vector.load %arg2[%c0_1, %c0_2] : memref<32x32xf32, #tpu.memory_space<vmem>>, vector<32x32xf32>
    %cst = arith.constant dense<0.000000e+00> : vector<32x32xf32>
    %2 = tpu.matmul %0, %1, %cst {dimension_numbers = #tpu.dot_dimension_numbers<[1], [0], [0], [1], [0, 0, 1, 1], [], []>} : vector<32x32xf32>, vector<32x32xf32>, vector<32x32xf32> -> vector<32x32xf32>
    %cst_3 = arith.constant 0.353553385 : f32
    %3 = vector.broadcast %cst_3 : f32 to vector<32x32xf32>
    %4 = arith.mulf %2, %3 : vector<32x32xf32>
    %c0_4 = arith.constant 0 : index
    %c0_5 = arith.constant 0 : index
    %5 = vector.load %arg8[%c0_4, %c0_5] : memref<32x32xf32, #tpu.memory_space<vmem>>, vector<32x32xf32>
    tpu.vector_store %arg8[%c0_4, %c0_5], %4 {strides = array<i32>} : memref<32x32xf32, #tpu.memory_space<vmem>>, vector<32x32xf32>,
    %c0_6 = arith.constant 0 : index
    %c0_7 = arith.constant 0 : index
    %6 = vector.load %arg3[%c0_6, %c0_7] : memref<32x32xf32, #tpu.memory_space<vmem>>, vector<32x32xf32>
    %cst_8 = arith.constant dense<0.000000e+00> : vector<32x32xf32>
    %7 = tpu.matmul %0, %6, %cst_8 {dimension_numbers = #tpu.dot_dimension_numbers<[1], [0], [0], [1], [0, 0, 1, 1], [], []>} : vector<32x32xf32>, vector<32x32xf32>, vector<32x32xf32> -> vector<32x32xf32>
    %c0_9 = arith.constant 0 : index
    %c0_10 = arith.constant 0 : index
    %8 = vector.load %arg9[%c0_9, %c0_10] : memref<32x32xf32, #tpu.memory_space<vmem>>, vector<32x32xf32>
    tpu.vector_store %arg9[%c0_9, %c0_10], %7 {strides = array<i32>} : memref<32x32xf32, #tpu.memory_space<vmem>>, vector<32x32xf32>,
    %c0_11 = arith.constant 0 : index
    %c0_12 = arith.constant 0 : index
    %9 = vector.load %arg4[%c0_11, %c0_12] : memref<32x32xf32, #tpu.memory_space<vmem>>, vector<32x32xf32>
    %cst_13 = arith.constant dense<0.000000e+00> : vector<32x32xf32>
    %10 = tpu.matmul %0, %9, %cst_13 {dimension_numbers = #tpu.dot_dimension_numbers<[1], [0], [0], [1], [0, 0, 1, 1], [], []>} : vector<32x32xf32>, vector<32x32xf32>, vector<32x32xf32> -> vector<32x32xf32>
    %c0_14 = arith.constant 0 : index
    %c0_15 = arith.constant 0 : index
    %11 = vector.load %arg10[%c0_14, %c0_15] : memref<32x32xf32, #tpu.memory_space<vmem>>, vector<32x32xf32>
    tpu.vector_store %arg10[%c0_14, %c0_15], %10 {strides = array<i32>} : memref<32x32xf32, #tpu.memory_space<vmem>>, vector<32x32xf32>,
    %c0_16 = arith.constant 0 : index
    %c0_17 = arith.constant 0 : index
    %12 = vector.load %arg8[%c0_16, %c0_17] : memref<32x32xf32, #tpu.memory_space<vmem>>, vector<16x8xf32>
    %c0_18 = arith.constant 0 : index
    %c0_19 = arith.constant 0 : index
    %13 = vector.load %arg9[%c0_18, %c0_19] : memref<32x32xf32, #tpu.memory_space<vmem>>, vector<16x8xf32>
    %c0_20 = arith.constant 0 : index
    %c0_21 = arith.constant 0 : index
    %14 = vector.load %arg10[%c0_20, %c0_21] : memref<32x32xf32, #tpu.memory_space<vmem>>, vector<16x8xf32>
    %cst_22 = arith.constant dense<0.000000e+00> : vector<16x16xf32>
    %15 = tpu.matmul %12, %13, %cst_22 {dimension_numbers = #tpu.dot_dimension_numbers<[1], [1], [0], [0], [0, 0, 1, 0], [], []>} : vector<16x8xf32>, vector<16x8xf32>, vector<16x16xf32> -> vector<16x16xf32>
    %cst_23 = arith.constant dense<0xFF800000> : vector<16xf32>
    %16 = vector.multi_reduction <maximumf>, %15, %cst_23 [1] : vector<16x16xf32> to vector<16xf32>
    %17 = vector.shape_cast %16 : vector<16xf32> to vector<16x1xf32>
    %18 = vector.broadcast %17 : vector<16x1xf32> to vector<16x16xf32>
    %19 = arith.subf %15, %18 : vector<16x16xf32>
    %20 = math.exp %19 : vector<16x16xf32>
    %cst_24 = arith.constant dense<0.000000e+00> : vector<16xf32>
    %21 = vector.multi_reduction <add>, %20, %cst_24 [1] : vector<16x16xf32> to vector<16xf32>
    %22 = vector.shape_cast %21 : vector<16xf32> to vector<16x1xf32>
    %cst_25 = arith.constant dense<0.000000e+00> : vector<16x8xf32>
    %23 = tpu.matmul %20, %14, %cst_25 {dimension_numbers = #tpu.dot_dimension_numbers<[1], [0], [0], [1], [0, 0, 1, 1], [], []>} : vector<16x16xf32>, vector<16x8xf32>, vector<16x8xf32> -> vector<16x8xf32>
    %24 = tpu.reciprocal %22 {approx = true} : vector<16x1xf32> -> vector<16x1xf32>
    %25 = vector.broadcast %24 : vector<16x1xf32> to vector<16x8xf32>
    %26 = arith.mulf %23, %25 : vector<16x8xf32>
    %c0_26 = arith.constant 0 : index
    %c0_27 = arith.constant 0 : index
    %27 = vector.load %arg11[%c0_26, %c0_27] : memref<32x32xf32, #tpu.memory_space<vmem>>, vector<16x8xf32>
    tpu.vector_store %arg11[%c0_26, %c0_27], %26 {strides = array<i32>} : memref<32x32xf32, #tpu.memory_space<vmem>>, vector<16x8xf32>,
    %c16 = arith.constant 16 : index
    %c0_28 = arith.constant 0 : index
    %28 = vector.load %arg8[%c16, %c0_28] : memref<32x32xf32, #tpu.memory_space<vmem>>, vector<16x8xf32>
    %c16_29 = arith.constant 16 : index
    %c0_30 = arith.constant 0 : index
    %29 = vector.load %arg9[%c16_29, %c0_30] : memref<32x32xf32, #tpu.memory_space<vmem>>, vector<16x8xf32>
    %c16_31 = arith.constant 16 : index
    %c0_32 = arith.constant 0 : index
    %30 = vector.load %arg10[%c16_31, %c0_32] : memref<32x32xf32, #tpu.memory_space<vmem>>, vector<16x8xf32>
    %cst_33 = arith.constant dense<0.000000e+00> : vector<16x16xf32>
    %31 = tpu.matmul %28, %29, %cst_33 {dimension_numbers = #tpu.dot_dimension_numbers<[1], [1], [0], [0], [0, 0, 1, 0], [], []>} : vector<16x8xf32>, vector<16x8xf32>, vector<16x16xf32> -> vector<16x16xf32>
    %cst_34 = arith.constant dense<0xFF800000> : vector<16xf32>
    %32 = vector.multi_reduction <maximumf>, %31, %cst_34 [1] : vector<16x16xf32> to vector<16xf32>
    %33 = vector.shape_cast %32 : vector<16xf32> to vector<16x1xf32>
    %34 = vector.broadcast %33 : vector<16x1xf32> to vector<16x16xf32>
    %35 = arith.subf %31, %34 : vector<16x16xf32>
    %36 = math.exp %35 : vector<16x16xf32>
    %cst_35 = arith.constant dense<0.000000e+00> : vector<16xf32>
    %37 = vector.multi_reduction <add>, %36, %cst_35 [1] : vector<16x16xf32> to vector<16xf32>
    %38 = vector.shape_cast %37 : vector<16xf32> to vector<16x1xf32>
    %cst_36 = arith.constant dense<0.000000e+00> : vector<16x8xf32>
    %39 = tpu.matmul %36, %30, %cst_36 {dimension_numbers = #tpu.dot_dimension_numbers<[1], [0], [0], [1], [0, 0, 1, 1], [], []>} : vector<16x16xf32>, vector<16x8xf32>, vector<16x8xf32> -> vector<16x8xf32>
    %40 = tpu.reciprocal %38 {approx = true} : vector<16x1xf32> -> vector<16x1xf32>
    %41 = vector.broadcast %40 : vector<16x1xf32> to vector<16x8xf32>
    %42 = arith.mulf %39, %41 : vector<16x8xf32>
    %c16_37 = arith.constant 16 : index
    %c0_38 = arith.constant 0 : index
    %43 = vector.load %arg11[%c16_37, %c0_38] : memref<32x32xf32, #tpu.memory_space<vmem>>, vector<16x8xf32>
    tpu.vector_store %arg11[%c16_37, %c0_38], %42 {strides = array<i32>} : memref<32x32xf32, #tpu.memory_space<vmem>>, vector<16x8xf32>,
    %c0_39 = arith.constant 0 : index
    %c8 = arith.constant 8 : index
    %44 = vector.load %arg8[%c0_39, %c8] : memref<32x32xf32, #tpu.memory_space<vmem>>, vector<16x8xf32>
    %c0_40 = arith.constant 0 : index
    %c8_41 = arith.constant 8 : index
    %45 = vector.load %arg9[%c0_40, %c8_41] : memref<32x32xf32, #tpu.memory_space<vmem>>, vector<16x8xf32>
    %c0_42 = arith.constant 0 : index
    %c8_43 = arith.constant 8 : index
    %46 = vector.load %arg10[%c0_42, %c8_43] : memref<32x32xf32, #tpu.memory_space<vmem>>, vector<16x8xf32>
    %cst_44 = arith.constant dense<0.000000e+00> : vector<16x16xf32>
    %47 = tpu.matmul %44, %45, %cst_44 {dimension_numbers = #tpu.dot_dimension_numbers<[1], [1], [0], [0], [0, 0, 1, 0], [], []>} : vector<16x8xf32>, vector<16x8xf32>, vector<16x16xf32> -> vector<16x16xf32>
    %cst_45 = arith.constant dense<0xFF800000> : vector<16xf32>
    %48 = vector.multi_reduction <maximumf>, %47, %cst_45 [1] : vector<16x16xf32> to vector<16xf32>
    %49 = vector.shape_cast %48 : vector<16xf32> to vector<16x1xf32>
    %50 = vector.broadcast %49 : vector<16x1xf32> to vector<16x16xf32>
    %51 = arith.subf %47, %50 : vector<16x16xf32>
    %52 = math.exp %51 : vector<16x16xf32>
    %cst_46 = arith.constant dense<0.000000e+00> : vector<16xf32>
    %53 = vector.multi_reduction <add>, %52, %cst_46 [1] : vector<16x16xf32> to vector<16xf32>
    %54 = vector.shape_cast %53 : vector<16xf32> to vector<16x1xf32>
    %cst_47 = arith.constant dense<0.000000e+00> : vector<16x8xf32>
    %55 = tpu.matmul %52, %46, %cst_47 {dimension_numbers = #tpu.dot_dimension_numbers<[1], [0], [0], [1], [0, 0, 1, 1], [], []>} : vector<16x16xf32>, vector<16x8xf32>, vector<16x8xf32> -> vector<16x8xf32>
    %56 = tpu.reciprocal %54 {approx = true} : vector<16x1xf32> -> vector<16x1xf32>
    %57 = vector.broadcast %56 : vector<16x1xf32> to vector<16x8xf32>
    %58 = arith.mulf %55, %57 : vector<16x8xf32>
    %c0_48 = arith.constant 0 : index
    %c8_49 = arith.constant 8 : index
    %59 = vector.load %arg11[%c0_48, %c8_49] : memref<32x32xf32, #tpu.memory_space<vmem>>, vector<16x8xf32>
    tpu.vector_store %arg11[%c0_48, %c8_49], %58 {strides = array<i32>} : memref<32x32xf32, #tpu.memory_space<vmem>>, vector<16x8xf32>,
    %c16_50 = arith.constant 16 : index
    %c8_51 = arith.constant 8 : index
    %60 = vector.load %arg8[%c16_50, %c8_51] : memref<32x32xf32, #tpu.memory_space<vmem>>, vector<16x8xf32>
    %c16_52 = arith.constant 16 : index
    %c8_53 = arith.constant 8 : index
    %61 = vector.load %arg9[%c16_52, %c8_53] : memref<32x32xf32, #tpu.memory_space<vmem>>, vector<16x8xf32>
    %c16_54 = arith.constant 16 : index
    %c8_55 = arith.constant 8 : index
    %62 = vector.load %arg10[%c16_54, %c8_55] : memref<32x32xf32, #tpu.memory_space<vmem>>, vector<16x8xf32>
    %cst_56 = arith.constant dense<0.000000e+00> : vector<16x16xf32>
    %63 = tpu.matmul %60, %61, %cst_56 {dimension_numbers = #tpu.dot_dimension_numbers<[1], [1], [0], [0], [0, 0, 1, 0], [], []>} : vector<16x8xf32>, vector<16x8xf32>, vector<16x16xf32> -> vector<16x16xf32>
    %cst_57 = arith.constant dense<0xFF800000> : vector<16xf32>
    %64 = vector.multi_reduction <maximumf>, %63, %cst_57 [1] : vector<16x16xf32> to vector<16xf32>
    %65 = vector.shape_cast %64 : vector<16xf32> to vector<16x1xf32>
    %66 = vector.broadcast %65 : vector<16x1xf32> to vector<16x16xf32>
    %67 = arith.subf %63, %66 : vector<16x16xf32>
    %68 = math.exp %67 : vector<16x16xf32>
    %cst_58 = arith.constant dense<0.000000e+00> : vector<16xf32>
    %69 = vector.multi_reduction <add>, %68, %cst_58 [1] : vector<16x16xf32> to vector<16xf32>
    %70 = vector.shape_cast %69 : vector<16xf32> to vector<16x1xf32>
    %cst_59 = arith.constant dense<0.000000e+00> : vector<16x8xf32>
    %71 = tpu.matmul %68, %62, %cst_59 {dimension_numbers = #tpu.dot_dimension_numbers<[1], [0], [0], [1], [0, 0, 1, 1], [], []>} : vector<16x16xf32>, vector<16x8xf32>, vector<16x8xf32> -> vector<16x8xf32>
    %72 = tpu.reciprocal %70 {approx = true} : vector<16x1xf32> -> vector<16x1xf32>
    %73 = vector.broadcast %72 : vector<16x1xf32> to vector<16x8xf32>
    %74 = arith.mulf %71, %73 : vector<16x8xf32>
    %c16_60 = arith.constant 16 : index
    %c8_61 = arith.constant 8 : index
    %75 = vector.load %arg11[%c16_60, %c8_61] : memref<32x32xf32, #tpu.memory_space<vmem>>, vector<16x8xf32>
    tpu.vector_store %arg11[%c16_60, %c8_61], %74 {strides = array<i32>} : memref<32x32xf32, #tpu.memory_space<vmem>>, vector<16x8xf32>,
    %c0_62 = arith.constant 0 : index
    %c16_63 = arith.constant 16 : index
    %76 = vector.load %arg8[%c0_62, %c16_63] : memref<32x32xf32, #tpu.memory_space<vmem>>, vector<16x8xf32>
    %c0_64 = arith.constant 0 : index
    %c16_65 = arith.constant 16 : index
    %77 = vector.load %arg9[%c0_64, %c16_65] : memref<32x32xf32, #tpu.memory_space<vmem>>, vector<16x8xf32>
    %c0_66 = arith.constant 0 : index
    %c16_67 = arith.constant 16 : index
    %78 = vector.load %arg10[%c0_66, %c16_67] : memref<32x32xf32, #tpu.memory_space<vmem>>, vector<16x8xf32>
    %cst_68 = arith.constant dense<0.000000e+00> : vector<16x16xf32>
    %79 = tpu.matmul %76, %77, %cst_68 {dimension_numbers = #tpu.dot_dimension_numbers<[1], [1], [0], [0], [0, 0, 1, 0], [], []>} : vector<16x8xf32>, vector<16x8xf32>, vector<16x16xf32> -> vector<16x16xf32>
    %cst_69 = arith.constant dense<0xFF800000> : vector<16xf32>
    %80 = vector.multi_reduction <maximumf>, %79, %cst_69 [1] : vector<16x16xf32> to vector<16xf32>
    %81 = vector.shape_cast %80 : vector<16xf32> to vector<16x1xf32>
    %82 = vector.broadcast %81 : vector<16x1xf32> to vector<16x16xf32>
    %83 = arith.subf %79, %82 : vector<16x16xf32>
    %84 = math.exp %83 : vector<16x16xf32>
    %cst_70 = arith.constant dense<0.000000e+00> : vector<16xf32>
    %85 = vector.multi_reduction <add>, %84, %cst_70 [1] : vector<16x16xf32> to vector<16xf32>
    %86 = vector.shape_cast %85 : vector<16xf32> to vector<16x1xf32>
    %cst_71 = arith.constant dense<0.000000e+00> : vector<16x8xf32>
    %87 = tpu.matmul %84, %78, %cst_71 {dimension_numbers = #tpu.dot_dimension_numbers<[1], [0], [0], [1], [0, 0, 1, 1], [], []>} : vector<16x16xf32>, vector<16x8xf32>, vector<16x8xf32> -> vector<16x8xf32>
    %88 = tpu.reciprocal %86 {approx = true} : vector<16x1xf32> -> vector<16x1xf32>
    %89 = vector.broadcast %88 : vector<16x1xf32> to vector<16x8xf32>
    %90 = arith.mulf %87, %89 : vector<16x8xf32>
    %c0_72 = arith.constant 0 : index
    %c16_73 = arith.constant 16 : index
    %91 = vector.load %arg11[%c0_72, %c16_73] : memref<32x32xf32, #tpu.memory_space<vmem>>, vector<16x8xf32>
    tpu.vector_store %arg11[%c0_72, %c16_73], %90 {strides = array<i32>} : memref<32x32xf32, #tpu.memory_space<vmem>>, vector<16x8xf32>,
    %c16_74 = arith.constant 16 : index
    %c16_75 = arith.constant 16 : index
    %92 = vector.load %arg8[%c16_74, %c16_75] : memref<32x32xf32, #tpu.memory_space<vmem>>, vector<16x8xf32>
    %c16_76 = arith.constant 16 : index
    %c16_77 = arith.constant 16 : index
    %93 = vector.load %arg9[%c16_76, %c16_77] : memref<32x32xf32, #tpu.memory_space<vmem>>, vector<16x8xf32>
    %c16_78 = arith.constant 16 : index
    %c16_79 = arith.constant 16 : index
    %94 = vector.load %arg10[%c16_78, %c16_79] : memref<32x32xf32, #tpu.memory_space<vmem>>, vector<16x8xf32>
    %cst_80 = arith.constant dense<0.000000e+00> : vector<16x16xf32>
    %95 = tpu.matmul %92, %93, %cst_80 {dimension_numbers = #tpu.dot_dimension_numbers<[1], [1], [0], [0], [0, 0, 1, 0], [], []>} : vector<16x8xf32>, vector<16x8xf32>, vector<16x16xf32> -> vector<16x16xf32>
    %cst_81 = arith.constant dense<0xFF800000> : vector<16xf32>
    %96 = vector.multi_reduction <maximumf>, %95, %cst_81 [1] : vector<16x16xf32> to vector<16xf32>
    %97 = vector.shape_cast %96 : vector<16xf32> to vector<16x1xf32>
    %98 = vector.broadcast %97 : vector<16x1xf32> to vector<16x16xf32>
    %99 = arith.subf %95, %98 : vector<16x16xf32>
    %100 = math.exp %99 : vector<16x16xf32>
    %cst_82 = arith.constant dense<0.000000e+00> : vector<16xf32>
    %101 = vector.multi_reduction <add>, %100, %cst_82 [1] : vector<16x16xf32> to vector<16xf32>
    %102 = vector.shape_cast %101 : vector<16xf32> to vector<16x1xf32>
    %cst_83 = arith.constant dense<0.000000e+00> : vector<16x8xf32>
    %103 = tpu.matmul %100, %94, %cst_83 {dimension_numbers = #tpu.dot_dimension_numbers<[1], [0], [0], [1], [0, 0, 1, 1], [], []>} : vector<16x16xf32>, vector<16x8xf32>, vector<16x8xf32> -> vector<16x8xf32>
    %104 = tpu.reciprocal %102 {approx = true} : vector<16x1xf32> -> vector<16x1xf32>
    %105 = vector.broadcast %104 : vector<16x1xf32> to vector<16x8xf32>
    %106 = arith.mulf %103, %105 : vector<16x8xf32>
    %c16_84 = arith.constant 16 : index
    %c16_85 = arith.constant 16 : index
    %107 = vector.load %arg11[%c16_84, %c16_85] : memref<32x32xf32, #tpu.memory_space<vmem>>, vector<16x8xf32>
    tpu.vector_store %arg11[%c16_84, %c16_85], %106 {strides = array<i32>} : memref<32x32xf32, #tpu.memory_space<vmem>>, vector<16x8xf32>,
    %c0_86 = arith.constant 0 : index
    %c24 = arith.constant 24 : index
    %108 = vector.load %arg8[%c0_86, %c24] : memref<32x32xf32, #tpu.memory_space<vmem>>, vector<16x8xf32>
    %c0_87 = arith.constant 0 : index
    %c24_88 = arith.constant 24 : index
    %109 = vector.load %arg9[%c0_87, %c24_88] : memref<32x32xf32, #tpu.memory_space<vmem>>, vector<16x8xf32>
    %c0_89 = arith.constant 0 : index
    %c24_90 = arith.constant 24 : index
    %110 = vector.load %arg10[%c0_89, %c24_90] : memref<32x32xf32, #tpu.memory_space<vmem>>, vector<16x8xf32>
    %cst_91 = arith.constant dense<0.000000e+00> : vector<16x16xf32>
    %111 = tpu.matmul %108, %109, %cst_91 {dimension_numbers = #tpu.dot_dimension_numbers<[1], [1], [0], [0], [0, 0, 1, 0], [], []>} : vector<16x8xf32>, vector<16x8xf32>, vector<16x16xf32> -> vector<16x16xf32>
    %cst_92 = arith.constant dense<0xFF800000> : vector<16xf32>
    %112 = vector.multi_reduction <maximumf>, %111, %cst_92 [1] : vector<16x16xf32> to vector<16xf32>
    %113 = vector.shape_cast %112 : vector<16xf32> to vector<16x1xf32>
    %114 = vector.broadcast %113 : vector<16x1xf32> to vector<16x16xf32>
    %115 = arith.subf %111, %114 : vector<16x16xf32>
    %116 = math.exp %115 : vector<16x16xf32>
    %cst_93 = arith.constant dense<0.000000e+00> : vector<16xf32>
    %117 = vector.multi_reduction <add>, %116, %cst_93 [1] : vector<16x16xf32> to vector<16xf32>
    %118 = vector.shape_cast %117 : vector<16xf32> to vector<16x1xf32>
    %cst_94 = arith.constant dense<0.000000e+00> : vector<16x8xf32>
    %119 = tpu.matmul %116, %110, %cst_94 {dimension_numbers = #tpu.dot_dimension_numbers<[1], [0], [0], [1], [0, 0, 1, 1], [], []>} : vector<16x16xf32>, vector<16x8xf32>, vector<16x8xf32> -> vector<16x8xf32>
    %120 = tpu.reciprocal %118 {approx = true} : vector<16x1xf32> -> vector<16x1xf32>
    %121 = vector.broadcast %120 : vector<16x1xf32> to vector<16x8xf32>
    %122 = arith.mulf %119, %121 : vector<16x8xf32>
    %c0_95 = arith.constant 0 : index
    %c24_96 = arith.constant 24 : index
    %123 = vector.load %arg11[%c0_95, %c24_96] : memref<32x32xf32, #tpu.memory_space<vmem>>, vector<16x8xf32>
    tpu.vector_store %arg11[%c0_95, %c24_96], %122 {strides = array<i32>} : memref<32x32xf32, #tpu.memory_space<vmem>>, vector<16x8xf32>,
    %c16_97 = arith.constant 16 : index
    %c24_98 = arith.constant 24 : index
    %124 = vector.load %arg8[%c16_97, %c24_98] : memref<32x32xf32, #tpu.memory_space<vmem>>, vector<16x8xf32>
    %c16_99 = arith.constant 16 : index
    %c24_100 = arith.constant 24 : index
    %125 = vector.load %arg9[%c16_99, %c24_100] : memref<32x32xf32, #tpu.memory_space<vmem>>, vector<16x8xf32>
    %c16_101 = arith.constant 16 : index
    %c24_102 = arith.constant 24 : index
    %126 = vector.load %arg10[%c16_101, %c24_102] : memref<32x32xf32, #tpu.memory_space<vmem>>, vector<16x8xf32>
    %cst_103 = arith.constant dense<0.000000e+00> : vector<16x16xf32>
    %127 = tpu.matmul %124, %125, %cst_103 {dimension_numbers = #tpu.dot_dimension_numbers<[1], [1], [0], [0], [0, 0, 1, 0], [], []>} : vector<16x8xf32>, vector<16x8xf32>, vector<16x16xf32> -> vector<16x16xf32>
    %cst_104 = arith.constant dense<0xFF800000> : vector<16xf32>
    %128 = vector.multi_reduction <maximumf>, %127, %cst_104 [1] : vector<16x16xf32> to vector<16xf32>
    %129 = vector.shape_cast %128 : vector<16xf32> to vector<16x1xf32>
    %130 = vector.broadcast %129 : vector<16x1xf32> to vector<16x16xf32>
    %131 = arith.subf %127, %130 : vector<16x16xf32>
    %132 = math.exp %131 : vector<16x16xf32>
    %cst_105 = arith.constant dense<0.000000e+00> : vector<16xf32>
    %133 = vector.multi_reduction <add>, %132, %cst_105 [1] : vector<16x16xf32> to vector<16xf32>
    %134 = vector.shape_cast %133 : vector<16xf32> to vector<16x1xf32>
    %cst_106 = arith.constant dense<0.000000e+00> : vector<16x8xf32>
    %135 = tpu.matmul %132, %126, %cst_106 {dimension_numbers = #tpu.dot_dimension_numbers<[1], [0], [0], [1], [0, 0, 1, 1], [], []>} : vector<16x16xf32>, vector<16x8xf32>, vector<16x8xf32> -> vector<16x8xf32>
    %136 = tpu.reciprocal %134 {approx = true} : vector<16x1xf32> -> vector<16x1xf32>
    %137 = vector.broadcast %136 : vector<16x1xf32> to vector<16x8xf32>
    %138 = arith.mulf %135, %137 : vector<16x8xf32>
    %c16_107 = arith.constant 16 : index
    %c24_108 = arith.constant 24 : index
    %139 = vector.load %arg11[%c16_107, %c24_108] : memref<32x32xf32, #tpu.memory_space<vmem>>, vector<16x8xf32>
    tpu.vector_store %arg11[%c16_107, %c24_108], %138 {strides = array<i32>} : memref<32x32xf32, #tpu.memory_space<vmem>>, vector<16x8xf32>,
    %c0_109 = arith.constant 0 : index
    %c0_110 = arith.constant 0 : index
    %140 = vector.load %arg11[%c0_109, %c0_110] : memref<32x32xf32, #tpu.memory_space<vmem>>, vector<32x32xf32>
    %c0_111 = arith.constant 0 : index
    %c0_112 = arith.constant 0 : index
    %141 = vector.load %arg5[%c0_111, %c0_112] : memref<32x32xf32, #tpu.memory_space<vmem>>, vector<32x32xf32>
    %cst_113 = arith.constant dense<0.000000e+00> : vector<32x32xf32>
    %142 = tpu.matmul %140, %141, %cst_113 {dimension_numbers = #tpu.dot_dimension_numbers<[1], [0], [0], [1], [0, 0, 1, 1], [], []>} : vector<32x32xf32>, vector<32x32xf32>, vector<32x32xf32> -> vector<32x32xf32>
    %c0_114 = arith.constant 0 : index
    %c0_115 = arith.constant 0 : index
    %143 = vector.load %arg6[%c0_114, %c0_115] : memref<1x32xf32, #tpu.memory_space<vmem>>, vector<1x32xf32>
    %144 = vector.broadcast %143 : vector<1x32xf32> to vector<32x32xf32>
    %145 = arith.addf %142, %144 : vector<32x32xf32>
    %c0_116 = arith.constant 0 : index
    %c0_117 = arith.constant 0 : index
    %146 = vector.load %arg7[%c0_116, %c0_117] : memref<32x32xf32, #tpu.memory_space<vmem>>, vector<32x32xf32>
    tpu.vector_store %arg7[%c0_116, %c0_117], %145 {strides = array<i32>} : memref<32x32xf32, #tpu.memory_space<vmem>>, vector<32x32xf32>,
    return
  }
  func.func @transform_0(%arg0: i32) -> (i32, i32) {
    %c0_i32 = arith.constant 0 : i32
    %c0_i32_0 = arith.constant 0 : i32
    return %arg0, %c0_i32 : i32, i32
  }
  func.func @transform_1(%arg0: i32) -> (i32, i32) {
    %c0_i32 = arith.constant 0 : i32
    %c0_i32_0 = arith.constant 0 : i32
    %c0_i32_1 = arith.constant 0 : i32
    return %c0_i32, %c0_i32_0 : i32, i32
  }
  func.func @transform_2(%arg0: i32) -> (i32, i32) {
    %c0_i32 = arith.constant 0 : i32
    %c0_i32_0 = arith.constant 0 : i32
    %c0_i32_1 = arith.constant 0 : i32
    return %c0_i32, %c0_i32_0 : i32, i32
  }
  func.func @transform_3(%arg0: i32) -> (i32, i32) {
    %c0_i32 = arith.constant 0 : i32
    %c0_i32_0 = arith.constant 0 : i32
    %c0_i32_1 = arith.constant 0 : i32
    return %c0_i32, %c0_i32_0 : i32, i32
  }
  func.func @transform_4(%arg0: i32) -> (i32, i32) {
    %c0_i32 = arith.constant 0 : i32
    %c0_i32_0 = arith.constant 0 : i32
    %c0_i32_1 = arith.constant 0 : i32
    return %c0_i32, %c0_i32_0 : i32, i32
  }
  func.func @transform_5(%arg0: i32) -> (i32, i32) {
    %c0_i32 = arith.constant 0 : i32
    %c0_i32_0 = arith.constant 0 : i32
    %c0_i32_1 = arith.constant 0 : i32
    return %c0_i32, %c0_i32_0 : i32, i32
  }
  func.func @transform_6(%arg0: i32) -> (i32, i32) {
    %c0_i32 = arith.constant 0 : i32
    %c0_i32_0 = arith.constant 0 : i32
    return %arg0, %c0_i32 : i32, i32
  }
}

</mosaic_0001>

<llo_original>
// kernel: tpu_custom_call.1
$region0: #{tpu_custom_call.1}
  #allocation0 [shape = 'u32[]', space=smem, size = 0x4, offset = 0x4, fixed_abs, tag = 'smem constant byte address 0x4 - core index']
  #allocation1 [shape = 'u32[144,128]{1,0:T(1,128)}', space=vmem, size = 0x12000, scoped, tag = 'internal scratch']
  #allocation2 [shape = 'f32[32,32]{1,0:T(8,128)}', space=vmem, size = 0x4000, scoped, tag = 'scratch operand']
  #allocation3 [shape = 'f32[32,32]{1,0:T(8,128)}', space=vmem, size = 0x4000, scoped, tag = 'scratch operand']
  #allocation4 [shape = 'f32[32,32]{1,0:T(8,128)}', space=vmem, size = 0x4000, scoped, tag = 'scratch operand']
  #allocation5 [shape = 'f32[32,32]{1,0:T(8,128)}', space=vmem, size = 0x4000, scoped, tag = 'scratch operand']
  %s0 = inlined_call_operand.hbm [shape: f32[32,32], index: 0, kind: input, shape index: {}]
  %s1 = inlined_call_operand.hbm [shape: f32[32,32], index: 1, kind: input, shape index: {}]
  %s2 = inlined_call_operand.hbm [shape: f32[32,32], index: 2, kind: input, shape index: {}]
  %s3 = inlined_call_operand.hbm [shape: f32[32,32], index: 3, kind: input, shape index: {}]
  %s4 = inlined_call_operand.hbm [shape: f32[32,32], index: 4, kind: input, shape index: {}]
  %s5 = inlined_call_operand.vmem [shape: f32[1,32], index: 5, kind: input, shape index: {}]
  %s6 = inlined_call_operand.hbm [shape: f32[32,32], index: 6, kind: output, shape index: {}]
  %s7 = sld [smem:[#allocation0]]
  $region54: #{tpu_custom_call.1} parent=0
    _
  %s9 = ssub.s32 1, %s7
  %s10 = scalar_select 0, %s9, %s7
  $region1: #{tpu_custom_call.1} parent=0
    #allocation6 [shape = 'u8[16384]{0}', space=vmem, size = 0x4000, scoped, tag = 'input window, operand 0, single buffered']
    #allocation7 [shape = 's32[1]{0}', space=sflag, size = 0x4, scoped, tag = 'scoped memory for tpu_custom_call.1']
    #allocation8 [shape = 's32[1]{0}', space=sflag, size = 0x4, scoped, tag = 'scoped memory for tpu_custom_call.1']
    #allocation9 [shape = 'u8[16384]{0}', space=vmem, size = 0x4000, scoped, tag = 'input window, operand 1, single buffered']
    #allocation10 [shape = 's32[1]{0}', space=sflag, size = 0x4, scoped, tag = 'scoped memory for tpu_custom_call.1']
    #allocation11 [shape = 'u8[16384]{0}', space=vmem, size = 0x4000, scoped, tag = 'input window, operand 2, single buffered']
    #allocation12 [shape = 'u8[16384]{0}', space=vmem, size = 0x4000, scoped, tag = 'input window, operand 3, single buffered']
    #allocation13 [shape = 's32[1]{0}', space=sflag, size = 0x4, scoped, tag = 'scoped memory for tpu_custom_call.1']
    #allocation14 [shape = 'u8[16384]{0}', space=vmem, size = 0x4000, scoped, tag = 'input window, operand 4, single buffered']
    #allocation15 [shape = 'u8[16384]{0}', space=vmem, size = 0x4000, scoped, tag = 'output window, operand 0, single buffered']
    %11 = vsyncpa [#allocation7], 0
    %12 = vsyncpa [#allocation10], 0
    %13 = vsyncpa [#allocation13], 0
    %14 = vsyncpa [#allocation8], 0
    // Predicated region
    $region2: #{tpu_custom_call.1} parent=1 // pred_check
      _
    $region3: #{tpu_custom_call.1} parent=1 // pred_check_branch
      %16 = sbr.rel (0) target = $region5
    $region4: #{tpu_custom_call.1} parent=1 // pred_region
      %s18 = ssub.s32 512, 512
      %19 = vsyncadd [#allocation7], %s18
      %s20 = sshll.u32 [#allocation6], 4
      %s21 = int_to_ptr.vmem [resolvable:$true] %s20
      %26 = dma.hbm_to_vmem [thread:$0]  %s0, 512, %s21, [#allocation7], 128, 128, 8
    $region5: #{tpu_custom_call.1} parent=1 // pred_fallthru
      _
    // Predicated region
    $region6: #{tpu_custom_call.1} parent=1 // pred_check
      _
    $region7: #{tpu_custom_call.1} parent=1 // pred_check_branch
      %28 = sbr.rel (0) target = $region9
    $region8: #{tpu_custom_call.1} parent=1 // pred_region
      %s30 = ssub.s32 512, 512
      %31 = vsyncadd [#allocation10], %s30
      %s32 = sshll.u32 [#allocation9], 4
      %s33 = int_to_ptr.vmem [resolvable:$true] %s32
      %38 = dma.hbm_to_vmem [thread:$0]  %s1, 512, %s33, [#allocation10], 128, 128, 8
    $region9: #{tpu_custom_call.1} parent=1 // pred_fallthru
      _
    // Predicated region
    $region10: #{tpu_custom_call.1} parent=1 // pred_check
      _
    $region11: #{tpu_custom_call.1} parent=1 // pred_check_branch
      %40 = sbr.rel (0) target = $region13
    $region12: #{tpu_custom_call.1} parent=1 // pred_region
      %s42 = ssub.s32 512, 512
      %43 = vsyncadd [#allocation10], %s42
      %s44 = sshll.u32 [#allocation11], 4
      %s45 = int_to_ptr.vmem [resolvable:$true] %s44
      %50 = dma.hbm_to_vmem [thread:$0]  %s2, 512, %s45, [#allocation10], 128, 128, 8
    $region13: #{tpu_custom_call.1} parent=1 // pred_fallthru
      _
    // Predicated region
    $region14: #{tpu_custom_call.1} parent=1 // pred_check
      _
    $region15: #{tpu_custom_call.1} parent=1 // pred_check_branch
      %52 = sbr.rel (0) target = $region17
    $region16: #{tpu_custom_call.1} parent=1 // pred_region
      %s54 = ssub.s32 512, 512
      %55 = vsyncadd [#allocation13], %s54
      %s56 = sshll.u32 [#allocation12], 4
      %s57 = int_to_ptr.vmem [resolvable:$true] %s56
      %62 = dma.hbm_to_vmem [thread:$0]  %s3, 512, %s57, [#allocation13], 128, 128, 8
    $region17: #{tpu_custom_call.1} parent=1 // pred_fallthru
      _
    // Predicated region
    $region18: #{tpu_custom_call.1} parent=1 // pred_check
      _
    $region19: #{tpu_custom_call.1} parent=1 // pred_check_branch
      %64 = sbr.rel (0) target = $region21
    $region20: #{tpu_custom_call.1} parent=1 // pred_region
      %s66 = ssub.s32 512, 512
      %67 = vsyncadd [#allocation13], %s66
      %s68 = sshll.u32 [#allocation14], 4
      %s69 = int_to_ptr.vmem [resolvable:$true] %s68
      %74 = dma.hbm_to_vmem [thread:$0]  %s4, 512, %s69, [#allocation13], 128, 128, 8
    $region21: #{tpu_custom_call.1} parent=1 // pred_fallthru
      _
    // Predicated region
    $region22: #{tpu_custom_call.1} parent=1 // pred_check
      _
    $region23: #{tpu_custom_call.1} parent=1 // pred_check_branch
      %76 = sbr.rel (0) target = $region25
    $region24: #{tpu_custom_call.1} parent=1 // pred_region
      _
    $region25: #{tpu_custom_call.1} parent=1 // pred_fallthru
      _
    // Predicated region
    $region26: #{tpu_custom_call.1} parent=1 // pred_check
      _
    $region27: #{tpu_custom_call.1} parent=1 // pred_check_branch
      %78 = sbr.rel (0) target = $region29
    $region28: #{tpu_custom_call.1} parent=1 // pred_region
      %79 = dma.done [#allocation7], 512
    $region29: #{tpu_custom_call.1} parent=1 // pred_fallthru
      _
    // Predicated region
    $region30: #{tpu_custom_call.1} parent=1 // pred_check
      _
    $region31: #{tpu_custom_call.1} parent=1 // pred_check_branch
      %81 = sbr.rel (0) target = $region33
    $region32: #{tpu_custom_call.1} parent=1 // pred_region
      %82 = dma.done [#allocation10], 512
    $region33: #{tpu_custom_call.1} parent=1 // pred_fallthru
      _
    // Predicated region
    $region34: #{tpu_custom_call.1} parent=1 // pred_check
      _
    $region35: #{tpu_custom_call.1} parent=1 // pred_check_branch
      %84 = sbr.rel (0) target = $region37
    $region36: #{tpu_custom_call.1} parent=1 // pred_region
      %85 = dma.done [#allocation10], 512
    $region37: #{tpu_custom_call.1} parent=1 // pred_fallthru
      _
    // Predicated region
    $region38: #{tpu_custom_call.1} parent=1 // pred_check
      _
    $region39: #{tpu_custom_call.1} parent=1 // pred_check_branch
      %87 = sbr.rel (0) target = $region41
    $region40: #{tpu_custom_call.1} parent=1 // pred_region
      %88 = dma.done [#allocation13], 512
    $region41: #{tpu_custom_call.1} parent=1 // pred_fallthru
      _
    // Predicated region
    $region42: #{tpu_custom_call.1} parent=1 // pred_check
      _
    $region43: #{tpu_custom_call.1} parent=1 // pred_check_branch
      %90 = sbr.rel (0) target = $region45
    $region44: #{tpu_custom_call.1} parent=1 // pred_region
      %91 = dma.done [#allocation13], 512
    $region45: #{tpu_custom_call.1} parent=1 // pred_fallthru
      _
    %v92 = vld [vmem:[#allocation6] sm:$0xff]
    %v93 = vld [vmem:[#allocation6 + $0x8] sm:$0xff]
    %v94 = vld [vmem:[#allocation6 + $0x10] sm:$0xff]
    %v95 = vld [vmem:[#allocation6 + $0x18] sm:$0xff]
    %v96 = vld [vmem:[#allocation9] sm:$0xff]
    %v97 = vld [vmem:[#allocation9 + $0x8] sm:$0xff]
    %v98 = vld [vmem:[#allocation9 + $0x10] sm:$0xff]
    %v99 = vld [vmem:[#allocation9 + $0x18] sm:$0xff]
    %vm100 = vcmask 261120
    %v102 = vsel %vm100, %v92, 0
    %v105 = vsel %vm100, %v93, 0
    %v108 = vsel %vm100, %v94, 0
    %v111 = vsel %vm100, %v95, 0
    %113 = vmatprep.subr.mxu0 0.0
    %114 = vmatpush1.msra.mxu0 %v96
    %115 = vmatprep.subr.mxu0 0.0
    %116 = vmatpush1.msra.mxu0 %v97
    %117 = vmatprep.subr.mxu0 0.0
    %118 = vmatpush1.msra.mxu0 %v98
    %119 = vmatprep.subr.mxu0 0.0
    %120 = vmatpush1.msra.mxu0 %v99
    %121 = vmatprep.subr.mxu0 0.0
    %122 = vmatpush1.msra.mxu0 0.0
    %123 = vmatprep.subr.mxu0 0.0
    %124 = vmatpush1.msra.mxu0 0.0
    %125 = vmatprep.subr.mxu0 0.0
    %126 = vmatpush1.msra.mxu0 0.0
    %127 = vmatprep.subr.mxu0 0.0
    %128 = vmatpush1.msra.mxu0 0.0
    %129 = vmatprep.subr.mxu0 0.0
    %130 = vmatpush1.msra.mxu0 0.0
    %131 = vmatprep.subr.mxu0 0.0
    %132 = vmatpush1.msra.mxu0 0.0
    %133 = vmatprep.subr.mxu0 0.0
    %134 = vmatpush1.msra.mxu0 0.0
    %135 = vmatprep.subr.mxu0 0.0
    %136 = vmatpush1.msra.mxu0 0.0
    %137 = vmatprep.subr.mxu0 0.0
    %138 = vmatpush1.msra.mxu0 0.0
    %139 = vmatprep.subr.mxu0 0.0
    %140 = vmatpush1.msra.mxu0 0.0
    %141 = vmatprep.subr.mxu0 0.0
    %142 = vmatpush1.msra.mxu0 0.0
    %143 = vmatprep.subr.mxu0 0.0
    %144 = vmatpush1.msra.mxu0 0.0
    %145 = vmatprep.subr.mxu0 0.0
    %146 = vmatpush1.msra.mxu0 0.0
    %147 = vmatprep.subr.mxu0 0.0
    %148 = vmatpush1.msra.mxu0 0.0
    %149 = vmatprep.subr.mxu0 0.0
    %150 = vmatpush1.msra.mxu0 0.0
    %151 = vmatprep.subr.mxu0 0.0
    %152 = vmatpush1.msra.mxu0 0.0
    %153 = vmatprep.subr.mxu0 0.0
    %154 = vmatpush1.msra.mxu0 0.0
    %155 = vmatprep.subr.mxu0 0.0
    %156 = vmatpush1.msra.mxu0 0.0
    %157 = vmatprep.subr.mxu0 0.0
    %158 = vmatpush1.msra.mxu0 0.0
    %159 = vmatprep.subr.mxu0 0.0
    %160 = vmatpush1.msra.mxu0 0.0
    %161 = vmatprep.subr.mxu0 0.0
    %162 = vmatpush1.msra.mxu0 0.0
    %163 = vmatprep.subr.mxu0 0.0
    %164 = vmatpush1.msra.mxu0 0.0
    %165 = vmatprep.subr.mxu0 0.0
    %166 = vmatpush1.msra.mxu0 0.0
    %167 = vmatprep.subr.mxu0 0.0
    %168 = vmatpush1.msra.mxu0 0.0
    %169 = vmatprep.subr.mxu0 0.0
    %170 = vmatpush1.msra.mxu0 0.0
    %171 = vmatprep.subr.mxu0 0.0
    %172 = vmatpush1.msra.mxu0 0.0
    %173 = vmatprep.subr.mxu0 0.0
    %174 = vmatpush1.msra.mxu0 0.0
    %175 = vmatprep.subr.mxu0 0.0
    %176 = vmatpush1.msra.mxu0 0.0
    %177 = vmatprep.mubr.f32.mxu0 0.0
    %178 = vmatmul.mubr.f32.gmra.mrb[0].mxu0 %v102
    %v179 = vpop.f32.mrb[0].mxu0
    %v180 = vadd.f32 0.0, %v179
    %v181 = vpop.f32.mrb[0].mxu0
    %182 = vmatprep.mubr.f32.mxu0 0.0
    %183 = vmatmul.mubr.f32.gmra.mrb[0].mxu0 %v105
    %v184 = vpop.f32.mrb[0].mxu0
    %v185 = vadd.f32 0.0, %v184
    %v186 = vpop.f32.mrb[0].mxu0
    %187 = vmatprep.mubr.f32.mxu0 0.0
    %188 = vmatmul.mubr.f32.gmra.mrb[0].mxu0 %v108
    %v189 = vpop.f32.mrb[0].mxu0
    %v190 = vadd.f32 0.0, %v189
    %v191 = vpop.f32.mrb[0].mxu0
    %192 = vmatprep.mubr.f32.mxu0 0.0
    %193 = vmatmul.mubr.f32.gmra.mrb[0].mxu0 %v111
    %v194 = vpop.f32.mrb[0].mxu0
    %v195 = vadd.f32 0.0, %v194
    %v196 = vpop.f32.mrb[0].mxu0
    %197 = vdwg.mxu0
    %v198 = vmul.f32 %v180, 0.35355338
    %v199 = vmul.f32 %v185, 0.35355338
    %v200 = vmul.f32 %v190, 0.35355338
    %v201 = vmul.f32 %v195, 0.35355338
    %202 = vst.msk [vmem:[#allocation2] sm:$0xff] %vm100, %v198
    %203 = vst.msk [vmem:[#allocation2 + $0x8] sm:$0xff] %vm100, %v199
    %204 = vst.msk [vmem:[#allocation2 + $0x10] sm:$0xff] %vm100, %v200
    %205 = vst.msk [vmem:[#allocation2 + $0x18] sm:$0xff] %vm100, %v201
    %v206 = vld [vmem:[#allocation11] sm:$0xff]
    %v207 = vld [vmem:[#allocation11 + $0x8] sm:$0xff]
    %v208 = vld [vmem:[#allocation11 + $0x10] sm:$0xff]
    %v209 = vld [vmem:[#allocation11 + $0x18] sm:$0xff]
    %210 = vmatprep.subr.mxu0 0.0
    %211 = vmatpush1.msra.mxu0 %v206
    %212 = vmatprep.subr.mxu0 0.0
    %213 = vmatpush1.msra.mxu0 %v207
    %214 = vmatprep.subr.mxu0 0.0
    %215 = vmatpush1.msra.mxu0 %v208
    %216 = vmatprep.subr.mxu0 0.0
    %217 = vmatpush1.msra.mxu0 %v209
    %218 = vmatprep.subr.mxu0 0.0
    %219 = vmatpush1.msra.mxu0 0.0
    %220 = vmatprep.subr.mxu0 0.0
    %221 = vmatpush1.msra.mxu0 0.0
    %222 = vmatprep.subr.mxu0 0.0
    %223 = vmatpush1.msra.mxu0 0.0
    %224 = vmatprep.subr.mxu0 0.0
    %225 = vmatpush1.msra.mxu0 0.0
    %226 = vmatprep.subr.mxu0 0.0
    %227 = vmatpush1.msra.mxu0 0.0
    %228 = vmatprep.subr.mxu0 0.0
    %229 = vmatpush1.msra.mxu0 0.0
    %230 = vmatprep.subr.mxu0 0.0
    %231 = vmatpush1.msra.mxu0 0.0
    %232 = vmatprep.subr.mxu0 0.0
    %233 = vmatpush1.msra.mxu0 0.0
    %234 = vmatprep.subr.mxu0 0.0
    %235 = vmatpush1.msra.mxu0 0.0
    %236 = vmatprep.subr.mxu0 0.0
    %237 = vmatpush1.msra.mxu0 0.0
    %238 = vmatprep.subr.mxu0 0.0
    %239 = vmatpush1.msra.mxu0 0.0
    %240 = vmatprep.subr.mxu0 0.0
    %241 = vmatpush1.msra.mxu0 0.0
    %242 = vmatprep.subr.mxu0 0.0
    %243 = vmatpush1.msra.mxu0 0.0
    %244 = vmatprep.subr.mxu0 0.0
    %245 = vmatpush1.msra.mxu0 0.0
    %246 = vmatprep.subr.mxu0 0.0
    %247 = vmatpush1.msra.mxu0 0.0
    %248 = vmatprep.subr.mxu0 0.0
    %249 = vmatpush1.msra.mxu0 0.0
    %250 = vmatprep.subr.mxu0 0.0
    %251 = vmatpush1.msra.mxu0 0.0
    %252 = vmatprep.subr.mxu0 0.0
    %253 = vmatpush1.msra.mxu0 0.0
    %254 = vmatprep.subr.mxu0 0.0
    %255 = vmatpush1.msra.mxu0 0.0
    %256 = vmatprep.subr.mxu0 0.0
    %257 = vmatpush1.msra.mxu0 0.0
    %258 = vmatprep.subr.mxu0 0.0
    %259 = vmatpush1.msra.mxu0 0.0
    %260 = vmatprep.subr.mxu0 0.0
    %261 = vmatpush1.msra.mxu0 0.0
    %262 = vmatprep.subr.mxu0 0.0
    %263 = vmatpush1.msra.mxu0 0.0
    %264 = vmatprep.subr.mxu0 0.0
    %265 = vmatpush1.msra.mxu0 0.0
    %266 = vmatprep.subr.mxu0 0.0
    %267 = vmatpush1.msra.mxu0 0.0
    %268 = vmatprep.subr.mxu0 0.0
    %269 = vmatpush1.msra.mxu0 0.0
    %270 = vmatprep.subr.mxu0 0.0
    %271 = vmatpush1.msra.mxu0 0.0
    %272 = vmatprep.subr.mxu0 0.0
    %273 = vmatpush1.msra.mxu0 0.0
    %274 = vmatprep.mubr.f32.mxu0 0.0
    %275 = vmatmul.mubr.f32.gmra.mrb[0].mxu0 %v102
    %v276 = vpop.f32.mrb[0].mxu0
    %v277 = vadd.f32 0.0, %v276
    %v278 = vpop.f32.mrb[0].mxu0
    %279 = vmatprep.mubr.f32.mxu0 0.0
    %280 = vmatmul.mubr.f32.gmra.mrb[0].mxu0 %v105
    %v281 = vpop.f32.mrb[0].mxu0
    %v282 = vadd.f32 0.0, %v281
    %v283 = vpop.f32.mrb[0].mxu0
    %284 = vmatprep.mubr.f32.mxu0 0.0
    %285 = vmatmul.mubr.f32.gmra.mrb[0].mxu0 %v108
    %v286 = vpop.f32.mrb[0].mxu0
    %v287 = vadd.f32 0.0, %v286
    %v288 = vpop.f32.mrb[0].mxu0
    %289 = vmatprep.mubr.f32.mxu0 0.0
    %290 = vmatmul.mubr.f32.gmra.mrb[0].mxu0 %v111
    %v291 = vpop.f32.mrb[0].mxu0
    %v292 = vadd.f32 0.0, %v291
    %v293 = vpop.f32.mrb[0].mxu0
    %294 = vdwg.mxu0
    %295 = vst.msk [vmem:[#allocation3] sm:$0xff] %vm100, %v277
    %296 = vst.msk [vmem:[#allocation3 + $0x8] sm:$0xff] %vm100, %v282
    %297 = vst.msk [vmem:[#allocation3 + $0x10] sm:$0xff] %vm100, %v287
    %298 = vst.msk [vmem:[#allocation3 + $0x18] sm:$0xff] %vm100, %v292
    %v299 = vld [vmem:[#allocation12] sm:$0xff]
    %v300 = vld [vmem:[#allocation12 + $0x8] sm:$0xff]
    %v301 = vld [vmem:[#allocation12 + $0x10] sm:$0xff]
    %v302 = vld [vmem:[#allocation12 + $0x18] sm:$0xff]
    %303 = vmatprep.subr.mxu0 0.0
    %304 = vmatpush1.msra.mxu0 %v299
    %305 = vmatprep.subr.mxu0 0.0
    %306 = vmatpush1.msra.mxu0 %v300
    %307 = vmatprep.subr.mxu0 0.0
    %308 = vmatpush1.msra.mxu0 %v301
    %309 = vmatprep.subr.mxu0 0.0
    %310 = vmatpush1.msra.mxu0 %v302
    %311 = vmatprep.subr.mxu0 0.0
    %312 = vmatpush1.msra.mxu0 0.0
    %313 = vmatprep.subr.mxu0 0.0
    %314 = vmatpush1.msra.mxu0 0.0
    %315 = vmatprep.subr.mxu0 0.0
    %316 = vmatpush1.msra.mxu0 0.0
    %317 = vmatprep.subr.mxu0 0.0
    %318 = vmatpush1.msra.mxu0 0.0
    %319 = vmatprep.subr.mxu0 0.0
    %320 = vmatpush1.msra.mxu0 0.0
    %321 = vmatprep.subr.mxu0 0.0
    %322 = vmatpush1.msra.mxu0 0.0
    %323 = vmatprep.subr.mxu0 0.0
    %324 = vmatpush1.msra.mxu0 0.0
    %325 = vmatprep.subr.mxu0 0.0
    %326 = vmatpush1.msra.mxu0 0.0
    %327 = vmatprep.subr.mxu0 0.0
    %328 = vmatpush1.msra.mxu0 0.0
    %329 = vmatprep.subr.mxu0 0.0
    %330 = vmatpush1.msra.mxu0 0.0
    %331 = vmatprep.subr.mxu0 0.0
    %332 = vmatpush1.msra.mxu0 0.0
    %333 = vmatprep.subr.mxu0 0.0
    %334 = vmatpush1.msra.mxu0 0.0
    %335 = vmatprep.subr.mxu0 0.0
    %336 = vmatpush1.msra.mxu0 0.0
    %337 = vmatprep.subr.mxu0 0.0
    %338 = vmatpush1.msra.mxu0 0.0
    %339 = vmatprep.subr.mxu0 0.0
    %340 = vmatpush1.msra.mxu0 0.0
    %341 = vmatprep.subr.mxu0 0.0
    %342 = vmatpush1.msra.mxu0 0.0
    %343 = vmatprep.subr.mxu0 0.0
    %344 = vmatpush1.msra.mxu0 0.0
    %345 = vmatprep.subr.mxu0 0.0
    %346 = vmatpush1.msra.mxu0 0.0
    %347 = vmatprep.subr.mxu0 0.0
    %348 = vmatpush1.msra.mxu0 0.0
    %349 = vmatprep.subr.mxu0 0.0
    %350 = vmatpush1.msra.mxu0 0.0
    %351 = vmatprep.subr.mxu0 0.0
    %352 = vmatpush1.msra.mxu0 0.0
    %353 = vmatprep.subr.mxu0 0.0
    %354 = vmatpush1.msra.mxu0 0.0
    %355 = vmatprep.subr.mxu0 0.0
    %356 = vmatpush1.msra.mxu0 0.0
    %357 = vmatprep.subr.mxu0 0.0
    %358 = vmatpush1.msra.mxu0 0.0
    %359 = vmatprep.subr.mxu0 0.0
    %360 = vmatpush1.msra.mxu0 0.0
    %361 = vmatprep.subr.mxu0 0.0
    %362 = vmatpush1.msra.mxu0 0.0
    %363 = vmatprep.subr.mxu0 0.0
    %364 = vmatpush1.msra.mxu0 0.0
    %365 = vmatprep.subr.mxu0 0.0
    %366 = vmatpush1.msra.mxu0 0.0
    %367 = vmatprep.mubr.f32.mxu0 0.0
    %368 = vmatmul.mubr.f32.gmra.mrb[0].mxu0 %v102
    %v369 = vpop.f32.mrb[0].mxu0
    %v370 = vadd.f32 0.0, %v369
    %v371 = vpop.f32.mrb[0].mxu0
    %372 = vmatprep.mubr.f32.mxu0 0.0
    %373 = vmatmul.mubr.f32.gmra.mrb[0].mxu0 %v105
    %v374 = vpop.f32.mrb[0].mxu0
    %v375 = vadd.f32 0.0, %v374
    %v376 = vpop.f32.mrb[0].mxu0
    %377 = vmatprep.mubr.f32.mxu0 0.0
    %378 = vmatmul.mubr.f32.gmra.mrb[0].mxu0 %v108
    %v379 = vpop.f32.mrb[0].mxu0
    %v380 = vadd.f32 0.0, %v379
    %v381 = vpop.f32.mrb[0].mxu0
    %382 = vmatprep.mubr.f32.mxu0 0.0
    %383 = vmatmul.mubr.f32.gmra.mrb[0].mxu0 %v111
    %v384 = vpop.f32.mrb[0].mxu0
    %v385 = vadd.f32 0.0, %v384
    %v386 = vpop.f32.mrb[0].mxu0
    %387 = vdwg.mxu0
    %388 = vst.msk [vmem:[#allocation4] sm:$0xff] %vm100, %v370
    %389 = vst.msk [vmem:[#allocation4 + $0x8] sm:$0xff] %vm100, %v375
    %390 = vst.msk [vmem:[#allocation4 + $0x10] sm:$0xff] %vm100, %v380
    %391 = vst.msk [vmem:[#allocation4 + $0x18] sm:$0xff] %vm100, %v385
    %v392 = vld [vmem:[#allocation2] sm:$0xff]
    %v393 = vld [vmem:[#allocation2 + $0x8] sm:$0xff]
    %v394 = vld [vmem:[#allocation3] sm:$0xff]
    %v395 = vld [vmem:[#allocation3 + $0x8] sm:$0xff]
    %v396 = vld [vmem:[#allocation4] sm:$0xff]
    %v397 = vld [vmem:[#allocation4 + $0x8] sm:$0xff]
    %vm398 = vcmask 64512
    %v400 = vsel %vm398, %v392, 0
    %v403 = vsel %vm398, %v393, 0
    %v406 = vsel %vm398, %v394, 0
    %v409 = vsel %vm398, %v395, 0
    %411 = vmatprep.subr.mxu0 0.0
    %412 = vmatpush1.xpose.msra.mxu0 %v406
    %413 = vmatprep.subr.mxu0 0.0
    %414 = vmatpush1.xpose.msra.mxu0 %v409
    %415 = vmatprep.subr.mxu0 0.0
    %416 = vmatpush1.xpose.msra.mxu0 0.0
    %417 = vmatprep.subr.mxu0 0.0
    %418 = vmatpush1.xpose.msra.mxu0 0.0
    %419 = vmatprep.subr.mxu0 0.0
    %420 = vmatpush1.xpose.msra.mxu0 0.0
    %421 = vmatprep.subr.mxu0 0.0
    %422 = vmatpush1.xpose.msra.mxu0 0.0
    %423 = vmatprep.subr.mxu0 0.0
    %424 = vmatpush1.xpose.msra.mxu0 0.0
    %425 = vmatprep.subr.mxu0 0.0
    %426 = vmatpush1.xpose.msra.mxu0 0.0
    %427 = vmatprep.subr.mxu0 0.0
    %428 = vmatpush1.xpose.msra.mxu0 0.0
    %429 = vmatprep.subr.mxu0 0.0
    %430 = vmatpush1.xpose.msra.mxu0 0.0
    %431 = vmatprep.subr.mxu0 0.0
    %432 = vmatpush1.xpose.msra.mxu0 0.0
    %433 = vmatprep.subr.mxu0 0.0
    %434 = vmatpush1.xpose.msra.mxu0 0.0
    %435 = vmatprep.subr.mxu0 0.0
    %436 = vmatpush1.xpose.msra.mxu0 0.0
    %437 = vmatprep.subr.mxu0 0.0
    %438 = vmatpush1.xpose.msra.mxu0 0.0
    %439 = vmatprep.subr.mxu0 0.0
    %440 = vmatpush1.xpose.msra.mxu0 0.0
    %441 = vmatprep.subr.mxu0 0.0
    %442 = vmatpush1.xpose.msra.mxu0 0.0
    %443 = vmatprep.subr.mxu0 0.0
    %444 = vmatpush1.xpose.msra.mxu0 0.0
    %445 = vmatprep.subr.mxu0 0.0
    %446 = vmatpush1.xpose.msra.mxu0 0.0
    %447 = vmatprep.subr.mxu0 0.0
    %448 = vmatpush1.xpose.msra.mxu0 0.0
    %449 = vmatprep.subr.mxu0 0.0
    %450 = vmatpush1.xpose.msra.mxu0 0.0
    %451 = vmatprep.subr.mxu0 0.0
    %452 = vmatpush1.xpose.msra.mxu0 0.0
    %453 = vmatprep.subr.mxu0 0.0
    %454 = vmatpush1.xpose.msra.mxu0 0.0
    %455 = vmatprep.subr.mxu0 0.0
    %456 = vmatpush1.xpose.msra.mxu0 0.0
    %457 = vmatprep.subr.mxu0 0.0
    %458 = vmatpush1.xpose.msra.mxu0 0.0
    %459 = vmatprep.subr.mxu0 0.0
    %460 = vmatpush1.xpose.msra.mxu0 0.0
    %461 = vmatprep.subr.mxu0 0.0
    %462 = vmatpush1.xpose.msra.mxu0 0.0
    %463 = vmatprep.subr.mxu0 0.0
    %464 = vmatpush1.xpose.msra.mxu0 0.0
    %465 = vmatprep.subr.mxu0 0.0
    %466 = vmatpush1.xpose.msra.mxu0 0.0
    %467 = vmatprep.subr.mxu0 0.0
    %468 = vmatpush1.xpose.msra.mxu0 0.0
    %469 = vmatprep.subr.mxu0 0.0
    %470 = vmatpush1.xpose.msra.mxu0 0.0
    %471 = vmatprep.subr.mxu0 0.0
    %472 = vmatpush1.xpose.msra.mxu0 0.0
    %473 = vmatprep.subr.mxu0 0.0
    %474 = vmatpush1.xpose.msra.mxu0 0.0
    %475 = vmatprep.mubr.f32.mxu0 0.0
    %476 = vmatmul.mubr.f32.gmra.mrb[0].mxu0 %v400
    %v477 = vpop.f32.mrb[0].mxu0
    %v478 = vadd.f32 0.0, %v477
    %v479 = vpop.f32.mrb[0].mxu0
    %480 = vmatprep.mubr.f32.mxu0 0.0
    %481 = vmatmul.mubr.f32.gmra.mrb[0].mxu0 %v403
    %v482 = vpop.f32.mrb[0].mxu0
    %v483 = vadd.f32 0.0, %v482
    %v484 = vpop.f32.mrb[0].mxu0
    %485 = vdwg.mxu0
    %vm486 = vcmask 130048
    %v487 = vsel %vm486, %v478, -inf
    %488 = vmax.xlane.f32.xlu0 %v487
    %v489 = vpop.xlane.xlu0 %488
    %v490 = vsel %vm486, %v483, -inf
    %491 = vmax.xlane.f32.xlu0 %v490
    %v492 = vpop.xlane.xlu0 %491
    %v493 = vsub.f32 %v478, %v489
    %v494 = vsub.f32 %v483, %v492
    %v495 = vmul.f32 %v493, 1.442695
    %v496 = vpow.pop %v495
    %v497 = vmul.f32 %v494, 1.442695
    %v498 = vpow.pop %v497
    %v499 = vsel %vm486, %v496, 0.0
    %500 = vadd.xlane.f32.xlu0 %v499
    %v501 = vpop.xlane.xlu0 %500
    %v502 = vsel %vm486, %v498, 0.0
    %503 = vadd.xlane.f32.xlu0 %v502
    %v504 = vpop.xlane.xlu0 %503
    %v506 = vsel %vm486, %v496, 0
    %v509 = vsel %vm486, %v498, 0
    %511 = vmatprep.subr.mxu0 0.0
    %512 = vmatpush1.msra.mxu0 %v396
    %513 = vmatprep.subr.mxu0 0.0
    %514 = vmatpush1.msra.mxu0 %v397
    %515 = vmatprep.subr.mxu0 0.0
    %516 = vmatpush1.msra.mxu0 0.0
    %517 = vmatprep.subr.mxu0 0.0
    %518 = vmatpush1.msra.mxu0 0.0
    %519 = vmatprep.subr.mxu0 0.0
    %520 = vmatpush1.msra.mxu0 0.0
    %521 = vmatprep.subr.mxu0 0.0
    %522 = vmatpush1.msra.mxu0 0.0
    %523 = vmatprep.subr.mxu0 0.0
    %524 = vmatpush1.msra.mxu0 0.0
    %525 = vmatprep.subr.mxu0 0.0
    %526 = vmatpush1.msra.mxu0 0.0
    %527 = vmatprep.subr.mxu0 0.0
    %528 = vmatpush1.msra.mxu0 0.0
    %529 = vmatprep.subr.mxu0 0.0
    %530 = vmatpush1.msra.mxu0 0.0
    %531 = vmatprep.subr.mxu0 0.0
    %532 = vmatpush1.msra.mxu0 0.0
    %533 = vmatprep.subr.mxu0 0.0
    %534 = vmatpush1.msra.mxu0 0.0
    %535 = vmatprep.subr.mxu0 0.0
    %536 = vmatpush1.msra.mxu0 0.0
    %537 = vmatprep.subr.mxu0 0.0
    %538 = vmatpush1.msra.mxu0 0.0
    %539 = vmatprep.subr.mxu0 0.0
    %540 = vmatpush1.msra.mxu0 0.0
    %541 = vmatprep.subr.mxu0 0.0
    %542 = vmatpush1.msra.mxu0 0.0
    %543 = vmatprep.subr.mxu0 0.0
    %544 = vmatpush1.msra.mxu0 0.0
    %545 = vmatprep.subr.mxu0 0.0
    %546 = vmatpush1.msra.mxu0 0.0
    %547 = vmatprep.subr.mxu0 0.0
    %548 = vmatpush1.msra.mxu0 0.0
    %549 = vmatprep.subr.mxu0 0.0
    %550 = vmatpush1.msra.mxu0 0.0
    %551 = vmatprep.subr.mxu0 0.0
    %552 = vmatpush1.msra.mxu0 0.0
    %553 = vmatprep.subr.mxu0 0.0
    %554 = vmatpush1.msra.mxu0 0.0
    %555 = vmatprep.subr.mxu0 0.0
    %556 = vmatpush1.msra.mxu0 0.0
    %557 = vmatprep.subr.mxu0 0.0
    %558 = vmatpush1.msra.mxu0 0.0
    %559 = vmatprep.subr.mxu0 0.0
    %560 = vmatpush1.msra.mxu0 0.0
    %561 = vmatprep.subr.mxu0 0.0
    %562 = vmatpush1.msra.mxu0 0.0
    %563 = vmatprep.subr.mxu0 0.0
    %564 = vmatpush1.msra.mxu0 0.0
    %565 = vmatprep.subr.mxu0 0.0
    %566 = vmatpush1.msra.mxu0 0.0
    %567 = vmatprep.subr.mxu0 0.0
    %568 = vmatpush1.msra.mxu0 0.0
    %569 = vmatprep.subr.mxu0 0.0
    %570 = vmatpush1.msra.mxu0 0.0
    %571 = vmatprep.subr.mxu0 0.0
    %572 = vmatpush1.msra.mxu0 0.0
    %573 = vmatprep.subr.mxu0 0.0
    %574 = vmatpush1.msra.mxu0 0.0
    %575 = vmatprep.mubr.f32.mxu0 0.0
    %576 = vmatmul.mubr.f32.gmra.mrb[0].mxu0 %v506
    %v577 = vpop.f32.mrb[0].mxu0
    %v578 = vadd.f32 0.0, %v577
    %v579 = vpop.f32.mrb[0].mxu0
    %580 = vmatprep.mubr.f32.mxu0 0.0
    %581 = vmatmul.mubr.f32.gmra.mrb[0].mxu0 %v509
    %v582 = vpop.f32.mrb[0].mxu0
    %v583 = vadd.f32 0.0, %v582
    %v584 = vpop.f32.mrb[0].mxu0
    %585 = vdwg.mxu0
    %v586 = vrcp.pop %v501
    %v587 = vrcp.pop %v504
    %v588 = vmul.f32 %v578, %v586
    %v589 = vmul.f32 %v583, %v587
    %590 = vst.msk [vmem:[#allocation5] sm:$0xff] %vm398, %v588
    %591 = vst.msk [vmem:[#allocation5 + $0x8] sm:$0xff] %vm398, %v589
    %v592 = vld [vmem:[#allocation2 + $0x10] sm:$0xff]
    %v593 = vld [vmem:[#allocation2 + $0x18] sm:$0xff]
    %v594 = vld [vmem:[#allocation3 + $0x10] sm:$0xff]
    %v595 = vld [vmem:[#allocation3 + $0x18] sm:$0xff]
    %v596 = vld [vmem:[#allocation4 + $0x10] sm:$0xff]
    %v597 = vld [vmem:[#allocation4 + $0x18] sm:$0xff]
    %v599 = vsel %vm398, %v592, 0
    %v602 = vsel %vm398, %v593, 0
    %v605 = vsel %vm398, %v594, 0
    %v608 = vsel %vm398, %v595, 0
    %610 = vmatprep.subr.mxu0 0.0
    %611 = vmatpush1.xpose.msra.mxu0 %v605
    %612 = vmatprep.subr.mxu0 0.0
    %613 = vmatpush1.xpose.msra.mxu0 %v608
    %614 = vmatprep.subr.mxu0 0.0
    %615 = vmatpush1.xpose.msra.mxu0 0.0
    %616 = vmatprep.subr.mxu0 0.0
    %617 = vmatpush1.xpose.msra.mxu0 0.0
    %618 = vmatprep.subr.mxu0 0.0
    %619 = vmatpush1.xpose.msra.mxu0 0.0
    %620 = vmatprep.subr.mxu0 0.0
    %621 = vmatpush1.xpose.msra.mxu0 0.0
    %622 = vmatprep.subr.mxu0 0.0
    %623 = vmatpush1.xpose.msra.mxu0 0.0
    %624 = vmatprep.subr.mxu0 0.0
    %625 = vmatpush1.xpose.msra.mxu0 0.0
    %626 = vmatprep.subr.mxu0 0.0
    %627 = vmatpush1.xpose.msra.mxu0 0.0
    %628 = vmatprep.subr.mxu0 0.0
    %629 = vmatpush1.xpose.msra.mxu0 0.0
    %630 = vmatprep.subr.mxu0 0.0
    %631 = vmatpush1.xpose.msra.mxu0 0.0
    %632 = vmatprep.subr.mxu0 0.0
    %633 = vmatpush1.xpose.msra.mxu0 0.0
    %634 = vmatprep.subr.mxu0 0.0
    %635 = vmatpush1.xpose.msra.mxu0 0.0
    %636 = vmatprep.subr.mxu0 0.0
    %637 = vmatpush1.xpose.msra.mxu0 0.0
    %638 = vmatprep.subr.mxu0 0.0
    %639 = vmatpush1.xpose.msra.mxu0 0.0
    %640 = vmatprep.subr.mxu0 0.0
    %641 = vmatpush1.xpose.msra.mxu0 0.0
    %642 = vmatprep.subr.mxu0 0.0
    %643 = vmatpush1.xpose.msra.mxu0 0.0
    %644 = vmatprep.subr.mxu0 0.0
    %645 = vmatpush1.xpose.msra.mxu0 0.0
    %646 = vmatprep.subr.mxu0 0.0
    %647 = vmatpush1.xpose.msra.mxu0 0.0
    %648 = vmatprep.subr.mxu0 0.0
    %649 = vmatpush1.xpose.msra.mxu0 0.0
    %650 = vmatprep.subr.mxu0 0.0
    %651 = vmatpush1.xpose.msra.mxu0 0.0
    %652 = vmatprep.subr.mxu0 0.0
    %653 = vmatpush1.xpose.msra.mxu0 0.0
    %654 = vmatprep.subr.mxu0 0.0
    %655 = vmatpush1.xpose.msra.mxu0 0.0
    %656 = vmatprep.subr.mxu0 0.0
    %657 = vmatpush1.xpose.msra.mxu0 0.0
    %658 = vmatprep.subr.mxu0 0.0
    %659 = vmatpush1.xpose.msra.mxu0 0.0
    %660 = vmatprep.subr.mxu0 0.0
    %661 = vmatpush1.xpose.msra.mxu0 0.0
    %662 = vmatprep.subr.mxu0 0.0
    %663 = vmatpush1.xpose.msra.mxu0 0.0
    %664 = vmatprep.subr.mxu0 0.0
    %665 = vmatpush1.xpose.msra.mxu0 0.0
    %666 = vmatprep.subr.mxu0 0.0
    %667 = vmatpush1.xpose.msra.mxu0 0.0
    %668 = vmatprep.subr.mxu0 0.0
    %669 = vmatpush1.xpose.msra.mxu0 0.0
    %670 = vmatprep.subr.mxu0 0.0
    %671 = vmatpush1.xpose.msra.mxu0 0.0
    %672 = vmatprep.subr.mxu0 0.0
    %673 = vmatpush1.xpose.msra.mxu0 0.0
    %674 = vmatprep.mubr.f32.mxu0 0.0
    %675 = vmatmul.mubr.f32.gmra.mrb[0].mxu0 %v599
    %v676 = vpop.f32.mrb[0].mxu0
    %v677 = vadd.f32 0.0, %v676
    %v678 = vpop.f32.mrb[0].mxu0
    %679 = vmatprep.mubr.f32.mxu0 0.0
    %680 = vmatmul.mubr.f32.gmra.mrb[0].mxu0 %v602
    %v681 = vpop.f32.mrb[0].mxu0
    %v682 = vadd.f32 0.0, %v681
    %v683 = vpop.f32.mrb[0].mxu0
    %684 = vdwg.mxu0
    %v685 = vsel %vm486, %v677, -inf
    %686 = vmax.xlane.f32.xlu0 %v685
    %v687 = vpop.xlane.xlu0 %686
    %v688 = vsel %vm486, %v682, -inf
    %689 = vmax.xlane.f32.xlu0 %v688
    %v690 = vpop.xlane.xlu0 %689
    %v691 = vsub.f32 %v677, %v687
    %v692 = vsub.f32 %v682, %v690
    %v693 = vmul.f32 %v691, 1.442695
    %v694 = vpow.pop %v693
    %v695 = vmul.f32 %v692, 1.442695
    %v696 = vpow.pop %v695
    %v697 = vsel %vm486, %v694, 0.0
    %698 = vadd.xlane.f32.xlu0 %v697
    %v699 = vpop.xlane.xlu0 %698
    %v700 = vsel %vm486, %v696, 0.0
    %701 = vadd.xlane.f32.xlu0 %v700
    %v702 = vpop.xlane.xlu0 %701
    %v704 = vsel %vm486, %v694, 0
    %v707 = vsel %vm486, %v696, 0
    %709 = vmatprep.subr.mxu0 0.0
    %710 = vmatpush1.msra.mxu0 %v596
    %711 = vmatprep.subr.mxu0 0.0
    %712 = vmatpush1.msra.mxu0 %v597
    %713 = vmatprep.subr.mxu0 0.0
    %714 = vmatpush1.msra.mxu0 0.0
    %715 = vmatprep.subr.mxu0 0.0
    %716 = vmatpush1.msra.mxu0 0.0
    %717 = vmatprep.subr.mxu0 0.0
    %718 = vmatpush1.msra.mxu0 0.0
    %719 = vmatprep.subr.mxu0 0.0
    %720 = vmatpush1.msra.mxu0 0.0
    %721 = vmatprep.subr.mxu0 0.0
    %722 = vmatpush1.msra.mxu0 0.0
    %723 = vmatprep.subr.mxu0 0.0
    %724 = vmatpush1.msra.mxu0 0.0
    %725 = vmatprep.subr.mxu0 0.0
    %726 = vmatpush1.msra.mxu0 0.0
    %727 = vmatprep.subr.mxu0 0.0
    %728 = vmatpush1.msra.mxu0 0.0
    %729 = vmatprep.subr.mxu0 0.0
    %730 = vmatpush1.msra.mxu0 0.0
    %731 = vmatprep.subr.mxu0 0.0
    %732 = vmatpush1.msra.mxu0 0.0
    %733 = vmatprep.subr.mxu0 0.0
    %734 = vmatpush1.msra.mxu0 0.0
    %735 = vmatprep.subr.mxu0 0.0
    %736 = vmatpush1.msra.mxu0 0.0
    %737 = vmatprep.subr.mxu0 0.0
    %738 = vmatpush1.msra.mxu0 0.0
    %739 = vmatprep.subr.mxu0 0.0
    %740 = vmatpush1.msra.mxu0 0.0
    %741 = vmatprep.subr.mxu0 0.0
    %742 = vmatpush1.msra.mxu0 0.0
    %743 = vmatprep.subr.mxu0 0.0
    %744 = vmatpush1.msra.mxu0 0.0
    %745 = vmatprep.subr.mxu0 0.0
    %746 = vmatpush1.msra.mxu0 0.0
    %747 = vmatprep.subr.mxu0 0.0
    %748 = vmatpush1.msra.mxu0 0.0
    %749 = vmatprep.subr.mxu0 0.0
    %750 = vmatpush1.msra.mxu0 0.0
    %751 = vmatprep.subr.mxu0 0.0
    %752 = vmatpush1.msra.mxu0 0.0
    %753 = vmatprep.subr.mxu0 0.0
    %754 = vmatpush1.msra.mxu0 0.0
    %755 = vmatprep.subr.mxu0 0.0
    %756 = vmatpush1.msra.mxu0 0.0
    %757 = vmatprep.subr.mxu0 0.0
    %758 = vmatpush1.msra.mxu0 0.0
    %759 = vmatprep.subr.mxu0 0.0
    %760 = vmatpush1.msra.mxu0 0.0
    %761 = vmatprep.subr.mxu0 0.0
    %762 = vmatpush1.msra.mxu0 0.0
    %763 = vmatprep.subr.mxu0 0.0
    %764 = vmatpush1.msra.mxu0 0.0
    %765 = vmatprep.subr.mxu0 0.0
    %766 = vmatpush1.msra.mxu0 0.0
    %767 = vmatprep.subr.mxu0 0.0
    %768 = vmatpush1.msra.mxu0 0.0
    %769 = vmatprep.subr.mxu0 0.0
    %770 = vmatpush1.msra.mxu0 0.0
    %771 = vmatprep.subr.mxu0 0.0
    %772 = vmatpush1.msra.mxu0 0.0
    %773 = vmatprep.mubr.f32.mxu0 0.0
    %774 = vmatmul.mubr.f32.gmra.mrb[0].mxu0 %v704
    %v775 = vpop.f32.mrb[0].mxu0
    %v776 = vadd.f32 0.0, %v775
    %v777 = vpop.f32.mrb[0].mxu0
    %778 = vmatprep.mubr.f32.mxu0 0.0
    %779 = vmatmul.mubr.f32.gmra.mrb[0].mxu0 %v707
    %v780 = vpop.f32.mrb[0].mxu0
    %v781 = vadd.f32 0.0, %v780
    %v782 = vpop.f32.mrb[0].mxu0
    %783 = vdwg.mxu0
    %v784 = vrcp.pop %v699
    %v785 = vrcp.pop %v702
    %v786 = vmul.f32 %v776, %v784
    %v787 = vmul.f32 %v781, %v785
    %788 = vst.msk [vmem:[#allocation5 + $0x10] sm:$0xff] %vm398, %v786
    %789 = vst.msk [vmem:[#allocation5 + $0x18] sm:$0xff] %vm398, %v787
    %v790 = vld [vmem:[#allocation2] sm:$0xff]
    %v791 = vld [vmem:[#allocation2 + $0x8] sm:$0xff]
    %v792 = vld [vmem:[#allocation3] sm:$0xff]
    %v793 = vld [vmem:[#allocation3 + $0x8] sm:$0xff]
    %v794 = vld [vmem:[#allocation4] sm:$0xff]
    %v795 = vld [vmem:[#allocation4 + $0x8] sm:$0xff]
    %798 = vrot.lane.b32.xlu0 %v790, 120
    %v799 = vpop.permute.xlu0 %798
    %800 = vrot.lane.b32.xlu0 %v791, 120
    %v801 = vpop.permute.xlu0 %800
    %804 = vrot.lane.b32.xlu0 %v792, 120
    %v805 = vpop.permute.xlu0 %804
    %806 = vrot.lane.b32.xlu0 %v793, 120
    %v807 = vpop.permute.xlu0 %806
    %v808 = vsel %vm398, %v799, 0
    %v810 = vsel %vm398, %v801, 0
    %v812 = vsel %vm398, %v805, 0
    %v814 = vsel %vm398, %v807, 0
    %816 = vmatprep.subr.mxu0 0.0
    %817 = vmatpush1.xpose.msra.mxu0 %v812
    %818 = vmatprep.subr.mxu0 0.0
    %819 = vmatpush1.xpose.msra.mxu0 %v814
    %820 = vmatprep.subr.mxu0 0.0
    %821 = vmatpush1.xpose.msra.mxu0 0.0
    %822 = vmatprep.subr.mxu0 0.0
    %823 = vmatpush1.xpose.msra.mxu0 0.0
    %824 = vmatprep.subr.mxu0 0.0
    %825 = vmatpush1.xpose.msra.mxu0 0.0
    %826 = vmatprep.subr.mxu0 0.0
    %827 = vmatpush1.xpose.msra.mxu0 0.0
    %828 = vmatprep.subr.mxu0 0.0
    %829 = vmatpush1.xpose.msra.mxu0 0.0
    %830 = vmatprep.subr.mxu0 0.0
    %831 = vmatpush1.xpose.msra.mxu0 0.0
    %832 = vmatprep.subr.mxu0 0.0
    %833 = vmatpush1.xpose.msra.mxu0 0.0
    %834 = vmatprep.subr.mxu0 0.0
    %835 = vmatpush1.xpose.msra.mxu0 0.0
    %836 = vmatprep.subr.mxu0 0.0
    %837 = vmatpush1.xpose.msra.mxu0 0.0
    %838 = vmatprep.subr.mxu0 0.0
    %839 = vmatpush1.xpose.msra.mxu0 0.0
    %840 = vmatprep.subr.mxu0 0.0
    %841 = vmatpush1.xpose.msra.mxu0 0.0
    %842 = vmatprep.subr.mxu0 0.0
    %843 = vmatpush1.xpose.msra.mxu0 0.0
    %844 = vmatprep.subr.mxu0 0.0
    %845 = vmatpush1.xpose.msra.mxu0 0.0
    %846 = vmatprep.subr.mxu0 0.0
    %847 = vmatpush1.xpose.msra.mxu0 0.0
    %848 = vmatprep.subr.mxu0 0.0
    %849 = vmatpush1.xpose.msra.mxu0 0.0
    %850 = vmatprep.subr.mxu0 0.0
    %851 = vmatpush1.xpose.msra.mxu0 0.0
    %852 = vmatprep.subr.mxu0 0.0
    %853 = vmatpush1.xpose.msra.mxu0 0.0
    %854 = vmatprep.subr.mxu0 0.0
    %855 = vmatpush1.xpose.msra.mxu0 0.0
    %856 = vmatprep.subr.mxu0 0.0
    %857 = vmatpush1.xpose.msra.mxu0 0.0
    %858 = vmatprep.subr.mxu0 0.0
    %859 = vmatpush1.xpose.msra.mxu0 0.0
    %860 = vmatprep.subr.mxu0 0.0
    %861 = vmatpush1.xpose.msra.mxu0 0.0
    %862 = vmatprep.subr.mxu0 0.0
    %863 = vmatpush1.xpose.msra.mxu0 0.0
    %864 = vmatprep.subr.mxu0 0.0
    %865 = vmatpush1.xpose.msra.mxu0 0.0
    %866 = vmatprep.subr.mxu0 0.0
    %867 = vmatpush1.xpose.msra.mxu0 0.0
    %868 = vmatprep.subr.mxu0 0.0
    %869 = vmatpush1.xpose.msra.mxu0 0.0
    %870 = vmatprep.subr.mxu0 0.0
    %871 = vmatpush1.xpose.msra.mxu0 0.0
    %872 = vmatprep.subr.mxu0 0.0
    %873 = vmatpush1.xpose.msra.mxu0 0.0
    %874 = vmatprep.subr.mxu0 0.0
    %875 = vmatpush1.xpose.msra.mxu0 0.0
    %876 = vmatprep.subr.mxu0 0.0
    %877 = vmatpush1.xpose.msra.mxu0 0.0
    %878 = vmatprep.subr.mxu0 0.0
    %879 = vmatpush1.xpose.msra.mxu0 0.0
    %880 = vmatprep.mubr.f32.mxu0 0.0
    %881 = vmatmul.mubr.f32.gmra.mrb[0].mxu0 %v808
    %v882 = vpop.f32.mrb[0].mxu0
    %v883 = vadd.f32 0.0, %v882
    %v884 = vpop.f32.mrb[0].mxu0
    %885 = vmatprep.mubr.f32.mxu0 0.0
    %886 = vmatmul.mubr.f32.gmra.mrb[0].mxu0 %v810
    %v887 = vpop.f32.mrb[0].mxu0
    %v888 = vadd.f32 0.0, %v887
    %v889 = vpop.f32.mrb[0].mxu0
    %890 = vdwg.mxu0
    %v891 = vsel %vm486, %v883, -inf
    %892 = vmax.xlane.f32.xlu0 %v891
    %v893 = vpop.xlane.xlu0 %892
    %v894 = vsel %vm486, %v888, -inf
    %895 = vmax.xlane.f32.xlu0 %v894
    %v896 = vpop.xlane.xlu0 %895
    %v897 = vsub.f32 %v883, %v893
    %v898 = vsub.f32 %v888, %v896
    %v899 = vmul.f32 %v897, 1.442695
    %v900 = vpow.pop %v899
    %v901 = vmul.f32 %v898, 1.442695
    %v902 = vpow.pop %v901
    %v903 = vsel %vm486, %v900, 0.0
    %904 = vadd.xlane.f32.xlu0 %v903
    %v905 = vpop.xlane.xlu0 %904
    %v906 = vsel %vm486, %v902, 0.0
    %907 = vadd.xlane.f32.xlu0 %v906
    %v908 = vpop.xlane.xlu0 %907
    %911 = vrot.lane.b32.xlu0 %v794, 120
    %v912 = vpop.permute.xlu0 %911
    %913 = vrot.lane.b32.xlu0 %v795, 120
    %v914 = vpop.permute.xlu0 %913
    %v918 = vsel %vm486, %v900, 0
    %v921 = vsel %vm486, %v902, 0
    %923 = vmatprep.subr.mxu0 0.0
    %924 = vmatpush1.msra.mxu0 %v912
    %925 = vmatprep.subr.mxu0 0.0
    %926 = vmatpush1.msra.mxu0 %v914
    %927 = vmatprep.subr.mxu0 0.0
    %928 = vmatpush1.msra.mxu0 0.0
    %929 = vmatprep.subr.mxu0 0.0
    %930 = vmatpush1.msra.mxu0 0.0
    %931 = vmatprep.subr.mxu0 0.0
    %932 = vmatpush1.msra.mxu0 0.0
    %933 = vmatprep.subr.mxu0 0.0
    %934 = vmatpush1.msra.mxu0 0.0
    %935 = vmatprep.subr.mxu0 0.0
    %936 = vmatpush1.msra.mxu0 0.0
    %937 = vmatprep.subr.mxu0 0.0
    %938 = vmatpush1.msra.mxu0 0.0
    %939 = vmatprep.subr.mxu0 0.0
    %940 = vmatpush1.msra.mxu0 0.0
    %941 = vmatprep.subr.mxu0 0.0
    %942 = vmatpush1.msra.mxu0 0.0
    %943 = vmatprep.subr.mxu0 0.0
    %944 = vmatpush1.msra.mxu0 0.0
    %945 = vmatprep.subr.mxu0 0.0
    %946 = vmatpush1.msra.mxu0 0.0
    %947 = vmatprep.subr.mxu0 0.0
    %948 = vmatpush1.msra.mxu0 0.0
    %949 = vmatprep.subr.mxu0 0.0
    %950 = vmatpush1.msra.mxu0 0.0
    %951 = vmatprep.subr.mxu0 0.0
    %952 = vmatpush1.msra.mxu0 0.0
    %953 = vmatprep.subr.mxu0 0.0
    %954 = vmatpush1.msra.mxu0 0.0
    %955 = vmatprep.subr.mxu0 0.0
    %956 = vmatpush1.msra.mxu0 0.0
    %957 = vmatprep.subr.mxu0 0.0
    %958 = vmatpush1.msra.mxu0 0.0
    %959 = vmatprep.subr.mxu0 0.0
    %960 = vmatpush1.msra.mxu0 0.0
    %961 = vmatprep.subr.mxu0 0.0
    %962 = vmatpush1.msra.mxu0 0.0
    %963 = vmatprep.subr.mxu0 0.0
    %964 = vmatpush1.msra.mxu0 0.0
    %965 = vmatprep.subr.mxu0 0.0
    %966 = vmatpush1.msra.mxu0 0.0
    %967 = vmatprep.subr.mxu0 0.0
    %968 = vmatpush1.msra.mxu0 0.0
    %969 = vmatprep.subr.mxu0 0.0
    %970 = vmatpush1.msra.mxu0 0.0
    %971 = vmatprep.subr.mxu0 0.0
    %972 = vmatpush1.msra.mxu0 0.0
    %973 = vmatprep.subr.mxu0 0.0
    %974 = vmatpush1.msra.mxu0 0.0
    %975 = vmatprep.subr.mxu0 0.0
    %976 = vmatpush1.msra.mxu0 0.0
    %977 = vmatprep.subr.mxu0 0.0
    %978 = vmatpush1.msra.mxu0 0.0
    %979 = vmatprep.subr.mxu0 0.0
    %980 = vmatpush1.msra.mxu0 0.0
    %981 = vmatprep.subr.mxu0 0.0
    %982 = vmatpush1.msra.mxu0 0.0
    %983 = vmatprep.subr.mxu0 0.0
    %984 = vmatpush1.msra.mxu0 0.0
    %985 = vmatprep.subr.mxu0 0.0
    %986 = vmatpush1.msra.mxu0 0.0
    %987 = vmatprep.mubr.f32.mxu0 0.0
    %988 = vmatmul.mubr.f32.gmra.mrb[0].mxu0 %v918
    %v989 = vpop.f32.mrb[0].mxu0
    %v990 = vadd.f32 0.0, %v989
    %v991 = vpop.f32.mrb[0].mxu0
    %992 = vmatprep.mubr.f32.mxu0 0.0
    %993 = vmatmul.mubr.f32.gmra.mrb[0].mxu0 %v921
    %v994 = vpop.f32.mrb[0].mxu0
    %v995 = vadd.f32 0.0, %v994
    %v996 = vpop.f32.mrb[0].mxu0
    %997 = vdwg.mxu0
    %v998 = vrcp.pop %v905
    %v999 = vrcp.pop %v908
    %v1000 = vmul.f32 %v990, %v998
    %v1001 = vmul.f32 %v995, %v999
    %1004 = vrot.lane.b32.xlu0 %v1000, 8
    %v1005 = vpop.permute.xlu0 %1004
    %1006 = vrot.lane.b32.xlu0 %v1001, 8
    %v1007 = vpop.permute.xlu0 %1006
    %vm1010 = vcmask 130112
    %1011 = vst.msk [vmem:[#allocation5] sm:$0xff] %vm1010, %v1005
    %1012 = vst.msk [vmem:[#allocation5 + $0x8] sm:$0xff] %vm1010, %v1007
    %v1013 = vld [vmem:[#allocation2 + $0x10] sm:$0xff]
    %v1014 = vld [vmem:[#allocation2 + $0x18] sm:$0xff]
    %v1015 = vld [vmem:[#allocation3 + $0x10] sm:$0xff]
    %v1016 = vld [vmem:[#allocation3 + $0x18] sm:$0xff]
    %v1017 = vld [vmem:[#allocation4 + $0x10] sm:$0xff]
    %v1018 = vld [vmem:[#allocation4 + $0x18] sm:$0xff]
    %1021 = vrot.lane.b32.xlu0 %v1013, 120
    %v1022 = vpop.permute.xlu0 %1021
    %1023 = vrot.lane.b32.xlu0 %v1014, 120
    %v1024 = vpop.permute.xlu0 %1023
    %1027 = vrot.lane.b32.xlu0 %v1015, 120
    %v1028 = vpop.permute.xlu0 %1027
    %1029 = vrot.lane.b32.xlu0 %v1016, 120
    %v1030 = vpop.permute.xlu0 %1029
    %v1031 = vsel %vm398, %v1022, 0
    %v1033 = vsel %vm398, %v1024, 0
    %v1035 = vsel %vm398, %v1028, 0
    %v1037 = vsel %vm398, %v1030, 0
    %1039 = vmatprep.subr.mxu0 0.0
    %1040 = vmatpush1.xpose.msra.mxu0 %v1035
    %1041 = vmatprep.subr.mxu0 0.0
    %1042 = vmatpush1.xpose.msra.mxu0 %v1037
    %1043 = vmatprep.subr.mxu0 0.0
    %1044 = vmatpush1.xpose.msra.mxu0 0.0
    %1045 = vmatprep.subr.mxu0 0.0
    %1046 = vmatpush1.xpose.msra.mxu0 0.0
    %1047 = vmatprep.subr.mxu0 0.0
    %1048 = vmatpush1.xpose.msra.mxu0 0.0
    %1049 = vmatprep.subr.mxu0 0.0
    %1050 = vmatpush1.xpose.msra.mxu0 0.0
    %1051 = vmatprep.subr.mxu0 0.0
    %1052 = vmatpush1.xpose.msra.mxu0 0.0
    %1053 = vmatprep.subr.mxu0 0.0
    %1054 = vmatpush1.xpose.msra.mxu0 0.0
    %1055 = vmatprep.subr.mxu0 0.0
    %1056 = vmatpush1.xpose.msra.mxu0 0.0
    %1057 = vmatprep.subr.mxu0 0.0
    %1058 = vmatpush1.xpose.msra.mxu0 0.0
    %1059 = vmatprep.subr.mxu0 0.0
    %1060 = vmatpush1.xpose.msra.mxu0 0.0
    %1061 = vmatprep.subr.mxu0 0.0
    %1062 = vmatpush1.xpose.msra.mxu0 0.0
    %1063 = vmatprep.subr.mxu0 0.0
    %1064 = vmatpush1.xpose.msra.mxu0 0.0
    %1065 = vmatprep.subr.mxu0 0.0
    %1066 = vmatpush1.xpose.msra.mxu0 0.0
    %1067 = vmatprep.subr.mxu0 0.0
    %1068 = vmatpush1.xpose.msra.mxu0 0.0
    %1069 = vmatprep.subr.mxu0 0.0
    %1070 = vmatpush1.xpose.msra.mxu0 0.0
    %1071 = vmatprep.subr.mxu0 0.0
    %1072 = vmatpush1.xpose.msra.mxu0 0.0
    %1073 = vmatprep.subr.mxu0 0.0
    %1074 = vmatpush1.xpose.msra.mxu0 0.0
    %1075 = vmatprep.subr.mxu0 0.0
    %1076 = vmatpush1.xpose.msra.mxu0 0.0
    %1077 = vmatprep.subr.mxu0 0.0
    %1078 = vmatpush1.xpose.msra.mxu0 0.0
    %1079 = vmatprep.subr.mxu0 0.0
    %1080 = vmatpush1.xpose.msra.mxu0 0.0
    %1081 = vmatprep.subr.mxu0 0.0
    %1082 = vmatpush1.xpose.msra.mxu0 0.0
    %1083 = vmatprep.subr.mxu0 0.0
    %1084 = vmatpush1.xpose.msra.mxu0 0.0
    %1085 = vmatprep.subr.mxu0 0.0
    %1086 = vmatpush1.xpose.msra.mxu0 0.0
    %1087 = vmatprep.subr.mxu0 0.0
    %1088 = vmatpush1.xpose.msra.mxu0 0.0
    %1089 = vmatprep.subr.mxu0 0.0
    %1090 = vmatpush1.xpose.msra.mxu0 0.0
    %1091 = vmatprep.subr.mxu0 0.0
    %1092 = vmatpush1.xpose.msra.mxu0 0.0
    %1093 = vmatprep.subr.mxu0 0.0
    %1094 = vmatpush1.xpose.msra.mxu0 0.0
    %1095 = vmatprep.subr.mxu0 0.0
    %1096 = vmatpush1.xpose.msra.mxu0 0.0
    %1097 = vmatprep.subr.mxu0 0.0
    %1098 = vmatpush1.xpose.msra.mxu0 0.0
    %1099 = vmatprep.subr.mxu0 0.0
    %1100 = vmatpush1.xpose.msra.mxu0 0.0
    %1101 = vmatprep.subr.mxu0 0.0
    %1102 = vmatpush1.xpose.msra.mxu0 0.0
    %1103 = vmatprep.mubr.f32.mxu0 0.0
    %1104 = vmatmul.mubr.f32.gmra.mrb[0].mxu0 %v1031
    %v1105 = vpop.f32.mrb[0].mxu0
    %v1106 = vadd.f32 0.0, %v1105
    %v1107 = vpop.f32.mrb[0].mxu0
    %1108 = vmatprep.mubr.f32.mxu0 0.0
    %1109 = vmatmul.mubr.f32.gmra.mrb[0].mxu0 %v1033
    %v1110 = vpop.f32.mrb[0].mxu0
    %v1111 = vadd.f32 0.0, %v1110
    %v1112 = vpop.f32.mrb[0].mxu0
    %1113 = vdwg.mxu0
    %v1114 = vsel %vm486, %v1106, -inf
    %1115 = vmax.xlane.f32.xlu0 %v1114
    %v1116 = vpop.xlane.xlu0 %1115
    %v1117 = vsel %vm486, %v1111, -inf
    %1118 = vmax.xlane.f32.xlu0 %v1117
    %v1119 = vpop.xlane.xlu0 %1118
    %v1120 = vsub.f32 %v1106, %v1116
    %v1121 = vsub.f32 %v1111, %v1119
    %v1122 = vmul.f32 %v1120, 1.442695
    %v1123 = vpow.pop %v1122
    %v1124 = vmul.f32 %v1121, 1.442695
    %v1125 = vpow.pop %v1124
    %v1126 = vsel %vm486, %v1123, 0.0
    %1127 = vadd.xlane.f32.xlu0 %v1126
    %v1128 = vpop.xlane.xlu0 %1127
    %v1129 = vsel %vm486, %v1125, 0.0
    %1130 = vadd.xlane.f32.xlu0 %v1129
    %v1131 = vpop.xlane.xlu0 %1130
    %1134 = vrot.lane.b32.xlu0 %v1017, 120
    %v1135 = vpop.permute.xlu0 %1134
    %1136 = vrot.lane.b32.xlu0 %v1018, 120
    %v1137 = vpop.permute.xlu0 %1136
    %v1141 = vsel %vm486, %v1123, 0
    %v1144 = vsel %vm486, %v1125, 0
    %1146 = vmatprep.subr.mxu0 0.0
    %1147 = vmatpush1.msra.mxu0 %v1135
    %1148 = vmatprep.subr.mxu0 0.0
    %1149 = vmatpush1.msra.mxu0 %v1137
    %1150 = vmatprep.subr.mxu0 0.0
    %1151 = vmatpush1.msra.mxu0 0.0
    %1152 = vmatprep.subr.mxu0 0.0
    %1153 = vmatpush1.msra.mxu0 0.0
    %1154 = vmatprep.subr.mxu0 0.0
    %1155 = vmatpush1.msra.mxu0 0.0
    %1156 = vmatprep.subr.mxu0 0.0
    %1157 = vmatpush1.msra.mxu0 0.0
    %1158 = vmatprep.subr.mxu0 0.0
    %1159 = vmatpush1.msra.mxu0 0.0
    %1160 = vmatprep.subr.mxu0 0.0
    %1161 = vmatpush1.msra.mxu0 0.0
    %1162 = vmatprep.subr.mxu0 0.0
    %1163 = vmatpush1.msra.mxu0 0.0
    %1164 = vmatprep.subr.mxu0 0.0
    %1165 = vmatpush1.msra.mxu0 0.0
    %1166 = vmatprep.subr.mxu0 0.0
    %1167 = vmatpush1.msra.mxu0 0.0
    %1168 = vmatprep.subr.mxu0 0.0
    %1169 = vmatpush1.msra.mxu0 0.0
    %1170 = vmatprep.subr.mxu0 0.0
    %1171 = vmatpush1.msra.mxu0 0.0
    %1172 = vmatprep.subr.mxu0 0.0
    %1173 = vmatpush1.msra.mxu0 0.0
    %1174 = vmatprep.subr.mxu0 0.0
    %1175 = vmatpush1.msra.mxu0 0.0
    %1176 = vmatprep.subr.mxu0 0.0
    %1177 = vmatpush1.msra.mxu0 0.0
    %1178 = vmatprep.subr.mxu0 0.0
    %1179 = vmatpush1.msra.mxu0 0.0
    %1180 = vmatprep.subr.mxu0 0.0
    %1181 = vmatpush1.msra.mxu0 0.0
    %1182 = vmatprep.subr.mxu0 0.0
    %1183 = vmatpush1.msra.mxu0 0.0
    %1184 = vmatprep.subr.mxu0 0.0
    %1185 = vmatpush1.msra.mxu0 0.0
    %1186 = vmatprep.subr.mxu0 0.0
    %1187 = vmatpush1.msra.mxu0 0.0
    %1188 = vmatprep.subr.mxu0 0.0
    %1189 = vmatpush1.msra.mxu0 0.0
    %1190 = vmatprep.subr.mxu0 0.0
    %1191 = vmatpush1.msra.mxu0 0.0
    %1192 = vmatprep.subr.mxu0 0.0
    %1193 = vmatpush1.msra.mxu0 0.0
    %1194 = vmatprep.subr.mxu0 0.0
    %1195 = vmatpush1.msra.mxu0 0.0
    %1196 = vmatprep.subr.mxu0 0.0
    %1197 = vmatpush1.msra.mxu0 0.0
    %1198 = vmatprep.subr.mxu0 0.0
    %1199 = vmatpush1.msra.mxu0 0.0
    %1200 = vmatprep.subr.mxu0 0.0
    %1201 = vmatpush1.msra.mxu0 0.0
    %1202 = vmatprep.subr.mxu0 0.0
    %1203 = vmatpush1.msra.mxu0 0.0
    %1204 = vmatprep.subr.mxu0 0.0
    %1205 = vmatpush1.msra.mxu0 0.0
    %1206 = vmatprep.subr.mxu0 0.0
    %1207 = vmatpush1.msra.mxu0 0.0
    %1208 = vmatprep.subr.mxu0 0.0
    %1209 = vmatpush1.msra.mxu0 0.0
    %1210 = vmatprep.mubr.f32.mxu0 0.0
    %1211 = vmatmul.mubr.f32.gmra.mrb[0].mxu0 %v1141
    %v1212 = vpop.f32.mrb[0].mxu0
    %v1213 = vadd.f32 0.0, %v1212
    %v1214 = vpop.f32.mrb[0].mxu0
    %1215 = vmatprep.mubr.f32.mxu0 0.0
    %1216 = vmatmul.mubr.f32.gmra.mrb[0].mxu0 %v1144
    %v1217 = vpop.f32.mrb[0].mxu0
    %v1218 = vadd.f32 0.0, %v1217
    %v1219 = vpop.f32.mrb[0].mxu0
    %1220 = vdwg.mxu0
    %v1221 = vrcp.pop %v1128
    %v1222 = vrcp.pop %v1131
    %v1223 = vmul.f32 %v1213, %v1221
    %v1224 = vmul.f32 %v1218, %v1222
    %1227 = vrot.lane.b32.xlu0 %v1223, 8
    %v1228 = vpop.permute.xlu0 %1227
    %1229 = vrot.lane.b32.xlu0 %v1224, 8
    %v1230 = vpop.permute.xlu0 %1229
    %1233 = vst.msk [vmem:[#allocation5 + $0x10] sm:$0xff] %vm1010, %v1228
    %1234 = vst.msk [vmem:[#allocation5 + $0x18] sm:$0xff] %vm1010, %v1230
    %v1235 = vld [vmem:[#allocation2] sm:$0xff]
    %v1236 = vld [vmem:[#allocation2 + $0x8] sm:$0xff]
    %v1237 = vld [vmem:[#allocation3] sm:$0xff]
    %v1238 = vld [vmem:[#allocation3 + $0x8] sm:$0xff]
    %v1239 = vld [vmem:[#allocation4] sm:$0xff]
    %v1240 = vld [vmem:[#allocation4 + $0x8] sm:$0xff]
    %1243 = vrot.lane.b32.xlu0 %v1235, 112
    %v1244 = vpop.permute.xlu0 %1243
    %1245 = vrot.lane.b32.xlu0 %v1236, 112
    %v1246 = vpop.permute.xlu0 %1245
    %1249 = vrot.lane.b32.xlu0 %v1237, 112
    %v1250 = vpop.permute.xlu0 %1249
    %1251 = vrot.lane.b32.xlu0 %v1238, 112
    %v1252 = vpop.permute.xlu0 %1251
    %v1253 = vsel %vm398, %v1244, 0
    %v1255 = vsel %vm398, %v1246, 0
    %v1257 = vsel %vm398, %v1250, 0
    %v1259 = vsel %vm398, %v1252, 0
    %1261 = vmatprep.subr.mxu0 0.0
    %1262 = vmatpush1.xpose.msra.mxu0 %v1257
    %1263 = vmatprep.subr.mxu0 0.0
    %1264 = vmatpush1.xpose.msra.mxu0 %v1259
    %1265 = vmatprep.subr.mxu0 0.0
    %1266 = vmatpush1.xpose.msra.mxu0 0.0
    %1267 = vmatprep.subr.mxu0 0.0
    %1268 = vmatpush1.xpose.msra.mxu0 0.0
    %1269 = vmatprep.subr.mxu0 0.0
    %1270 = vmatpush1.xpose.msra.mxu0 0.0
    %1271 = vmatprep.subr.mxu0 0.0
    %1272 = vmatpush1.xpose.msra.mxu0 0.0
    %1273 = vmatprep.subr.mxu0 0.0
    %1274 = vmatpush1.xpose.msra.mxu0 0.0
    %1275 = vmatprep.subr.mxu0 0.0
    %1276 = vmatpush1.xpose.msra.mxu0 0.0
    %1277 = vmatprep.subr.mxu0 0.0
    %1278 = vmatpush1.xpose.msra.mxu0 0.0
    %1279 = vmatprep.subr.mxu0 0.0
    %1280 = vmatpush1.xpose.msra.mxu0 0.0
    %1281 = vmatprep.subr.mxu0 0.0
    %1282 = vmatpush1.xpose.msra.mxu0 0.0
    %1283 = vmatprep.subr.mxu0 0.0
    %1284 = vmatpush1.xpose.msra.mxu0 0.0
    %1285 = vmatprep.subr.mxu0 0.0
    %1286 = vmatpush1.xpose.msra.mxu0 0.0
    %1287 = vmatprep.subr.mxu0 0.0
    %1288 = vmatpush1.xpose.msra.mxu0 0.0
    %1289 = vmatprep.subr.mxu0 0.0
    %1290 = vmatpush1.xpose.msra.mxu0 0.0
    %1291 = vmatprep.subr.mxu0 0.0
    %1292 = vmatpush1.xpose.msra.mxu0 0.0
    %1293 = vmatprep.subr.mxu0 0.0
    %1294 = vmatpush1.xpose.msra.mxu0 0.0
    %1295 = vmatprep.subr.mxu0 0.0
    %1296 = vmatpush1.xpose.msra.mxu0 0.0
    %1297 = vmatprep.subr.mxu0 0.0
    %1298 = vmatpush1.xpose.msra.mxu0 0.0
    %1299 = vmatprep.subr.mxu0 0.0
    %1300 = vmatpush1.xpose.msra.mxu0 0.0
    %1301 = vmatprep.subr.mxu0 0.0
    %1302 = vmatpush1.xpose.msra.mxu0 0.0
    %1303 = vmatprep.subr.mxu0 0.0
    %1304 = vmatpush1.xpose.msra.mxu0 0.0
    %1305 = vmatprep.subr.mxu0 0.0
    %1306 = vmatpush1.xpose.msra.mxu0 0.0
    %1307 = vmatprep.subr.mxu0 0.0
    %1308 = vmatpush1.xpose.msra.mxu0 0.0
    %1309 = vmatprep.subr.mxu0 0.0
    %1310 = vmatpush1.xpose.msra.mxu0 0.0
    %1311 = vmatprep.subr.mxu0 0.0
    %1312 = vmatpush1.xpose.msra.mxu0 0.0
    %1313 = vmatprep.subr.mxu0 0.0
    %1314 = vmatpush1.xpose.msra.mxu0 0.0
    %1315 = vmatprep.subr.mxu0 0.0
    %1316 = vmatpush1.xpose.msra.mxu0 0.0
    %1317 = vmatprep.subr.mxu0 0.0
    %1318 = vmatpush1.xpose.msra.mxu0 0.0
    %1319 = vmatprep.subr.mxu0 0.0
    %1320 = vmatpush1.xpose.msra.mxu0 0.0
    %1321 = vmatprep.subr.mxu0 0.0
    %1322 = vmatpush1.xpose.msra.mxu0 0.0
    %1323 = vmatprep.subr.mxu0 0.0
    %1324 = vmatpush1.xpose.msra.mxu0 0.0
    %1325 = vmatprep.mubr.f32.mxu0 0.0
    %1326 = vmatmul.mubr.f32.gmra.mrb[0].mxu0 %v1253
    %v1327 = vpop.f32.mrb[0].mxu0
    %v1328 = vadd.f32 0.0, %v1327
    %v1329 = vpop.f32.mrb[0].mxu0
    %1330 = vmatprep.mubr.f32.mxu0 0.0
    %1331 = vmatmul.mubr.f32.gmra.mrb[0].mxu0 %v1255
    %v1332 = vpop.f32.mrb[0].mxu0
    %v1333 = vadd.f32 0.0, %v1332
    %v1334 = vpop.f32.mrb[0].mxu0
    %1335 = vdwg.mxu0
    %v1336 = vsel %vm486, %v1328, -inf
    %1337 = vmax.xlane.f32.xlu0 %v1336
    %v1338 = vpop.xlane.xlu0 %1337
    %v1339 = vsel %vm486, %v1333, -inf
    %1340 = vmax.xlane.f32.xlu0 %v1339
    %v1341 = vpop.xlane.xlu0 %1340
    %v1342 = vsub.f32 %v1328, %v1338
    %v1343 = vsub.f32 %v1333, %v1341
    %v1344 = vmul.f32 %v1342, 1.442695
    %v1345 = vpow.pop %v1344
    %v1346 = vmul.f32 %v1343, 1.442695
    %v1347 = vpow.pop %v1346
    %v1348 = vsel %vm486, %v1345, 0.0
    %1349 = vadd.xlane.f32.xlu0 %v1348
    %v1350 = vpop.xlane.xlu0 %1349
    %v1351 = vsel %vm486, %v1347, 0.0
    %1352 = vadd.xlane.f32.xlu0 %v1351
    %v1353 = vpop.xlane.xlu0 %1352
    %1356 = vrot.lane.b32.xlu0 %v1239, 112
    %v1357 = vpop.permute.xlu0 %1356
    %1358 = vrot.lane.b32.xlu0 %v1240, 112
    %v1359 = vpop.permute.xlu0 %1358
    %v1363 = vsel %vm486, %v1345, 0
    %v1366 = vsel %vm486, %v1347, 0
    %1368 = vmatprep.subr.mxu0 0.0
    %1369 = vmatpush1.msra.mxu0 %v1357
    %1370 = vmatprep.subr.mxu0 0.0
    %1371 = vmatpush1.msra.mxu0 %v1359
    %1372 = vmatprep.subr.mxu0 0.0
    %1373 = vmatpush1.msra.mxu0 0.0
    %1374 = vmatprep.subr.mxu0 0.0
    %1375 = vmatpush1.msra.mxu0 0.0
    %1376 = vmatprep.subr.mxu0 0.0
    %1377 = vmatpush1.msra.mxu0 0.0
    %1378 = vmatprep.subr.mxu0 0.0
    %1379 = vmatpush1.msra.mxu0 0.0
    %1380 = vmatprep.subr.mxu0 0.0
    %1381 = vmatpush1.msra.mxu0 0.0
    %1382 = vmatprep.subr.mxu0 0.0
    %1383 = vmatpush1.msra.mxu0 0.0
    %1384 = vmatprep.subr.mxu0 0.0
    %1385 = vmatpush1.msra.mxu0 0.0
    %1386 = vmatprep.subr.mxu0 0.0
    %1387 = vmatpush1.msra.mxu0 0.0
    %1388 = vmatprep.subr.mxu0 0.0
    %1389 = vmatpush1.msra.mxu0 0.0
    %1390 = vmatprep.subr.mxu0 0.0
    %1391 = vmatpush1.msra.mxu0 0.0
    %1392 = vmatprep.subr.mxu0 0.0
    %1393 = vmatpush1.msra.mxu0 0.0
    %1394 = vmatprep.subr.mxu0 0.0
    %1395 = vmatpush1.msra.mxu0 0.0
    %1396 = vmatprep.subr.mxu0 0.0
    %1397 = vmatpush1.msra.mxu0 0.0
    %1398 = vmatprep.subr.mxu0 0.0
    %1399 = vmatpush1.msra.mxu0 0.0
    %1400 = vmatprep.subr.mxu0 0.0
    %1401 = vmatpush1.msra.mxu0 0.0
    %1402 = vmatprep.subr.mxu0 0.0
    %1403 = vmatpush1.msra.mxu0 0.0
    %1404 = vmatprep.subr.mxu0 0.0
    %1405 = vmatpush1.msra.mxu0 0.0
    %1406 = vmatprep.subr.mxu0 0.0
    %1407 = vmatpush1.msra.mxu0 0.0
    %1408 = vmatprep.subr.mxu0 0.0
    %1409 = vmatpush1.msra.mxu0 0.0
    %1410 = vmatprep.subr.mxu0 0.0
    %1411 = vmatpush1.msra.mxu0 0.0
    %1412 = vmatprep.subr.mxu0 0.0
    %1413 = vmatpush1.msra.mxu0 0.0
    %1414 = vmatprep.subr.mxu0 0.0
    %1415 = vmatpush1.msra.mxu0 0.0
    %1416 = vmatprep.subr.mxu0 0.0
    %1417 = vmatpush1.msra.mxu0 0.0
    %1418 = vmatprep.subr.mxu0 0.0
    %1419 = vmatpush1.msra.mxu0 0.0
    %1420 = vmatprep.subr.mxu0 0.0
    %1421 = vmatpush1.msra.mxu0 0.0
    %1422 = vmatprep.subr.mxu0 0.0
    %1423 = vmatpush1.msra.mxu0 0.0
    %1424 = vmatprep.subr.mxu0 0.0
    %1425 = vmatpush1.msra.mxu0 0.0
    %1426 = vmatprep.subr.mxu0 0.0
    %1427 = vmatpush1.msra.mxu0 0.0
    %1428 = vmatprep.subr.mxu0 0.0
    %1429 = vmatpush1.msra.mxu0 0.0
    %1430 = vmatprep.subr.mxu0 0.0
    %1431 = vmatpush1.msra.mxu0 0.0
    %1432 = vmatprep.mubr.f32.mxu0 0.0
    %1433 = vmatmul.mubr.f32.gmra.mrb[0].mxu0 %v1363
    %v1434 = vpop.f32.mrb[0].mxu0
    %v1435 = vadd.f32 0.0, %v1434
    %v1436 = vpop.f32.mrb[0].mxu0
    %1437 = vmatprep.mubr.f32.mxu0 0.0
    %1438 = vmatmul.mubr.f32.gmra.mrb[0].mxu0 %v1366
    %v1439 = vpop.f32.mrb[0].mxu0
    %v1440 = vadd.f32 0.0, %v1439
    %v1441 = vpop.f32.mrb[0].mxu0
    %1442 = vdwg.mxu0
    %v1443 = vrcp.pop %v1350
    %v1444 = vrcp.pop %v1353
    %v1445 = vmul.f32 %v1435, %v1443
    %v1446 = vmul.f32 %v1440, %v1444
    %1449 = vrot.lane.b32.xlu0 %v1445, 16
    %v1450 = vpop.permute.xlu0 %1449
    %1451 = vrot.lane.b32.xlu0 %v1446, 16
    %v1452 = vpop.permute.xlu0 %1451
    %vm1455 = vcmask 195712
    %1456 = vst.msk [vmem:[#allocation5] sm:$0xff] %vm1455, %v1450
    %1457 = vst.msk [vmem:[#allocation5 + $0x8] sm:$0xff] %vm1455, %v1452
    %v1458 = vld [vmem:[#allocation2 + $0x10] sm:$0xff]
    %v1459 = vld [vmem:[#allocation2 + $0x18] sm:$0xff]
    %v1460 = vld [vmem:[#allocation3 + $0x10] sm:$0xff]
    %v1461 = vld [vmem:[#allocation3 + $0x18] sm:$0xff]
    %v1462 = vld [vmem:[#allocation4 + $0x10] sm:$0xff]
    %v1463 = vld [vmem:[#allocation4 + $0x18] sm:$0xff]
    %1466 = vrot.lane.b32.xlu0 %v1458, 112
    %v1467 = vpop.permute.xlu0 %1466
    %1468 = vrot.lane.b32.xlu0 %v1459, 112
    %v1469 = vpop.permute.xlu0 %1468
    %1472 = vrot.lane.b32.xlu0 %v1460, 112
    %v1473 = vpop.permute.xlu0 %1472
    %1474 = vrot.lane.b32.xlu0 %v1461, 112
    %v1475 = vpop.permute.xlu0 %1474
    %v1476 = vsel %vm398, %v1467, 0
    %v1478 = vsel %vm398, %v1469, 0
    %v1480 = vsel %vm398, %v1473, 0
    %v1482 = vsel %vm398, %v1475, 0
    %1484 = vmatprep.subr.mxu0 0.0
    %1485 = vmatpush1.xpose.msra.mxu0 %v1480
    %1486 = vmatprep.subr.mxu0 0.0
    %1487 = vmatpush1.xpose.msra.mxu0 %v1482
    %1488 = vmatprep.subr.mxu0 0.0
    %1489 = vmatpush1.xpose.msra.mxu0 0.0
    %1490 = vmatprep.subr.mxu0 0.0
    %1491 = vmatpush1.xpose.msra.mxu0 0.0
    %1492 = vmatprep.subr.mxu0 0.0
    %1493 = vmatpush1.xpose.msra.mxu0 0.0
    %1494 = vmatprep.subr.mxu0 0.0
    %1495 = vmatpush1.xpose.msra.mxu0 0.0
    %1496 = vmatprep.subr.mxu0 0.0
    %1497 = vmatpush1.xpose.msra.mxu0 0.0
    %1498 = vmatprep.subr.mxu0 0.0
    %1499 = vmatpush1.xpose.msra.mxu0 0.0
    %1500 = vmatprep.subr.mxu0 0.0
    %1501 = vmatpush1.xpose.msra.mxu0 0.0
    %1502 = vmatprep.subr.mxu0 0.0
    %1503 = vmatpush1.xpose.msra.mxu0 0.0
    %1504 = vmatprep.subr.mxu0 0.0
    %1505 = vmatpush1.xpose.msra.mxu0 0.0
    %1506 = vmatprep.subr.mxu0 0.0
    %1507 = vmatpush1.xpose.msra.mxu0 0.0
    %1508 = vmatprep.subr.mxu0 0.0
    %1509 = vmatpush1.xpose.msra.mxu0 0.0
    %1510 = vmatprep.subr.mxu0 0.0
    %1511 = vmatpush1.xpose.msra.mxu0 0.0
    %1512 = vmatprep.subr.mxu0 0.0
    %1513 = vmatpush1.xpose.msra.mxu0 0.0
    %1514 = vmatprep.subr.mxu0 0.0
    %1515 = vmatpush1.xpose.msra.mxu0 0.0
    %1516 = vmatprep.subr.mxu0 0.0
    %1517 = vmatpush1.xpose.msra.mxu0 0.0
    %1518 = vmatprep.subr.mxu0 0.0
    %1519 = vmatpush1.xpose.msra.mxu0 0.0
    %1520 = vmatprep.subr.mxu0 0.0
    %1521 = vmatpush1.xpose.msra.mxu0 0.0
    %1522 = vmatprep.subr.mxu0 0.0
    %1523 = vmatpush1.xpose.msra.mxu0 0.0
    %1524 = vmatprep.subr.mxu0 0.0
    %1525 = vmatpush1.xpose.msra.mxu0 0.0
    %1526 = vmatprep.subr.mxu0 0.0
    %1527 = vmatpush1.xpose.msra.mxu0 0.0
    %1528 = vmatprep.subr.mxu0 0.0
    %1529 = vmatpush1.xpose.msra.mxu0 0.0
    %1530 = vmatprep.subr.mxu0 0.0
    %1531 = vmatpush1.xpose.msra.mxu0 0.0
    %1532 = vmatprep.subr.mxu0 0.0
    %1533 = vmatpush1.xpose.msra.mxu0 0.0
    %1534 = vmatprep.subr.mxu0 0.0
    %1535 = vmatpush1.xpose.msra.mxu0 0.0
    %1536 = vmatprep.subr.mxu0 0.0
    %1537 = vmatpush1.xpose.msra.mxu0 0.0
    %1538 = vmatprep.subr.mxu0 0.0
    %1539 = vmatpush1.xpose.msra.mxu0 0.0
    %1540 = vmatprep.subr.mxu0 0.0
    %1541 = vmatpush1.xpose.msra.mxu0 0.0
    %1542 = vmatprep.subr.mxu0 0.0
    %1543 = vmatpush1.xpose.msra.mxu0 0.0
    %1544 = vmatprep.subr.mxu0 0.0
    %1545 = vmatpush1.xpose.msra.mxu0 0.0
    %1546 = vmatprep.subr.mxu0 0.0
    %1547 = vmatpush1.xpose.msra.mxu0 0.0
    %1548 = vmatprep.mubr.f32.mxu0 0.0
    %1549 = vmatmul.mubr.f32.gmra.mrb[0].mxu0 %v1476
    %v1550 = vpop.f32.mrb[0].mxu0
    %v1551 = vadd.f32 0.0, %v1550
    %v1552 = vpop.f32.mrb[0].mxu0
    %1553 = vmatprep.mubr.f32.mxu0 0.0
    %1554 = vmatmul.mubr.f32.gmra.mrb[0].mxu0 %v1478
    %v1555 = vpop.f32.mrb[0].mxu0
    %v1556 = vadd.f32 0.0, %v1555
    %v1557 = vpop.f32.mrb[0].mxu0
    %1558 = vdwg.mxu0
    %v1559 = vsel %vm486, %v1551, -inf
    %1560 = vmax.xlane.f32.xlu0 %v1559
    %v1561 = vpop.xlane.xlu0 %1560
    %v1562 = vsel %vm486, %v1556, -inf
    %1563 = vmax.xlane.f32.xlu0 %v1562
    %v1564 = vpop.xlane.xlu0 %1563
    %v1565 = vsub.f32 %v1551, %v1561
    %v1566 = vsub.f32 %v1556, %v1564
    %v1567 = vmul.f32 %v1565, 1.442695
    %v1568 = vpow.pop %v1567
    %v1569 = vmul.f32 %v1566, 1.442695
    %v1570 = vpow.pop %v1569
    %v1571 = vsel %vm486, %v1568, 0.0
    %1572 = vadd.xlane.f32.xlu0 %v1571
    %v1573 = vpop.xlane.xlu0 %1572
    %v1574 = vsel %vm486, %v1570, 0.0
    %1575 = vadd.xlane.f32.xlu0 %v1574
    %v1576 = vpop.xlane.xlu0 %1575
    %1579 = vrot.lane.b32.xlu0 %v1462, 112
    %v1580 = vpop.permute.xlu0 %1579
    %1581 = vrot.lane.b32.xlu0 %v1463, 112
    %v1582 = vpop.permute.xlu0 %1581
    %v1586 = vsel %vm486, %v1568, 0
    %v1589 = vsel %vm486, %v1570, 0
    %1591 = vmatprep.subr.mxu0 0.0
    %1592 = vmatpush1.msra.mxu0 %v1580
    %1593 = vmatprep.subr.mxu0 0.0
    %1594 = vmatpush1.msra.mxu0 %v1582
    %1595 = vmatprep.subr.mxu0 0.0
    %1596 = vmatpush1.msra.mxu0 0.0
    %1597 = vmatprep.subr.mxu0 0.0
    %1598 = vmatpush1.msra.mxu0 0.0
    %1599 = vmatprep.subr.mxu0 0.0
    %1600 = vmatpush1.msra.mxu0 0.0
    %1601 = vmatprep.subr.mxu0 0.0
    %1602 = vmatpush1.msra.mxu0 0.0
    %1603 = vmatprep.subr.mxu0 0.0
    %1604 = vmatpush1.msra.mxu0 0.0
    %1605 = vmatprep.subr.mxu0 0.0
    %1606 = vmatpush1.msra.mxu0 0.0
    %1607 = vmatprep.subr.mxu0 0.0
    %1608 = vmatpush1.msra.mxu0 0.0
    %1609 = vmatprep.subr.mxu0 0.0
    %1610 = vmatpush1.msra.mxu0 0.0
    %1611 = vmatprep.subr.mxu0 0.0
    %1612 = vmatpush1.msra.mxu0 0.0
    %1613 = vmatprep.subr.mxu0 0.0
    %1614 = vmatpush1.msra.mxu0 0.0
    %1615 = vmatprep.subr.mxu0 0.0
    %1616 = vmatpush1.msra.mxu0 0.0
    %1617 = vmatprep.subr.mxu0 0.0
    %1618 = vmatpush1.msra.mxu0 0.0
    %1619 = vmatprep.subr.mxu0 0.0
    %1620 = vmatpush1.msra.mxu0 0.0
    %1621 = vmatprep.subr.mxu0 0.0
    %1622 = vmatpush1.msra.mxu0 0.0
    %1623 = vmatprep.subr.mxu0 0.0
    %1624 = vmatpush1.msra.mxu0 0.0
    %1625 = vmatprep.subr.mxu0 0.0
    %1626 = vmatpush1.msra.mxu0 0.0
    %1627 = vmatprep.subr.mxu0 0.0
    %1628 = vmatpush1.msra.mxu0 0.0
    %1629 = vmatprep.subr.mxu0 0.0
    %1630 = vmatpush1.msra.mxu0 0.0
    %1631 = vmatprep.subr.mxu0 0.0
    %1632 = vmatpush1.msra.mxu0 0.0
    %1633 = vmatprep.subr.mxu0 0.0
    %1634 = vmatpush1.msra.mxu0 0.0
    %1635 = vmatprep.subr.mxu0 0.0
    %1636 = vmatpush1.msra.mxu0 0.0
    %1637 = vmatprep.subr.mxu0 0.0
    %1638 = vmatpush1.msra.mxu0 0.0
    %1639 = vmatprep.subr.mxu0 0.0
    %1640 = vmatpush1.msra.mxu0 0.0
    %1641 = vmatprep.subr.mxu0 0.0
    %1642 = vmatpush1.msra.mxu0 0.0
    %1643 = vmatprep.subr.mxu0 0.0
    %1644 = vmatpush1.msra.mxu0 0.0
    %1645 = vmatprep.subr.mxu0 0.0
    %1646 = vmatpush1.msra.mxu0 0.0
    %1647 = vmatprep.subr.mxu0 0.0
    %1648 = vmatpush1.msra.mxu0 0.0
    %1649 = vmatprep.subr.mxu0 0.0
    %1650 = vmatpush1.msra.mxu0 0.0
    %1651 = vmatprep.subr.mxu0 0.0
    %1652 = vmatpush1.msra.mxu0 0.0
    %1653 = vmatprep.subr.mxu0 0.0
    %1654 = vmatpush1.msra.mxu0 0.0
    %1655 = vmatprep.mubr.f32.mxu0 0.0
    %1656 = vmatmul.mubr.f32.gmra.mrb[0].mxu0 %v1586
    %v1657 = vpop.f32.mrb[0].mxu0
    %v1658 = vadd.f32 0.0, %v1657
    %v1659 = vpop.f32.mrb[0].mxu0
    %1660 = vmatprep.mubr.f32.mxu0 0.0
    %1661 = vmatmul.mubr.f32.gmra.mrb[0].mxu0 %v1589
    %v1662 = vpop.f32.mrb[0].mxu0
    %v1663 = vadd.f32 0.0, %v1662
    %v1664 = vpop.f32.mrb[0].mxu0
    %1665 = vdwg.mxu0
    %v1666 = vrcp.pop %v1573
    %v1667 = vrcp.pop %v1576
    %v1668 = vmul.f32 %v1658, %v1666
    %v1669 = vmul.f32 %v1663, %v1667
    %1672 = vrot.lane.b32.xlu0 %v1668, 16
    %v1673 = vpop.permute.xlu0 %1672
    %1674 = vrot.lane.b32.xlu0 %v1669, 16
    %v1675 = vpop.permute.xlu0 %1674
    %1678 = vst.msk [vmem:[#allocation5 + $0x10] sm:$0xff] %vm1455, %v1673
    %1679 = vst.msk [vmem:[#allocation5 + $0x18] sm:$0xff] %vm1455, %v1675
    %v1680 = vld [vmem:[#allocation2] sm:$0xff]
    %v1681 = vld [vmem:[#allocation2 + $0x8] sm:$0xff]
    %v1682 = vld [vmem:[#allocation3] sm:$0xff]
    %v1683 = vld [vmem:[#allocation3 + $0x8] sm:$0xff]
    %v1684 = vld [vmem:[#allocation4] sm:$0xff]
    %v1685 = vld [vmem:[#allocation4 + $0x8] sm:$0xff]
    %1688 = vrot.lane.b32.xlu0 %v1680, 104
    %v1689 = vpop.permute.xlu0 %1688
    %1690 = vrot.lane.b32.xlu0 %v1681, 104
    %v1691 = vpop.permute.xlu0 %1690
    %1694 = vrot.lane.b32.xlu0 %v1682, 104
    %v1695 = vpop.permute.xlu0 %1694
    %1696 = vrot.lane.b32.xlu0 %v1683, 104
    %v1697 = vpop.permute.xlu0 %1696
    %v1698 = vsel %vm398, %v1689, 0
    %v1700 = vsel %vm398, %v1691, 0
    %v1702 = vsel %vm398, %v1695, 0
    %v1704 = vsel %vm398, %v1697, 0
    %1706 = vmatprep.subr.mxu0 0.0
    %1707 = vmatpush1.xpose.msra.mxu0 %v1702
    %1708 = vmatprep.subr.mxu0 0.0
    %1709 = vmatpush1.xpose.msra.mxu0 %v1704
    %1710 = vmatprep.subr.mxu0 0.0
    %1711 = vmatpush1.xpose.msra.mxu0 0.0
    %1712 = vmatprep.subr.mxu0 0.0
    %1713 = vmatpush1.xpose.msra.mxu0 0.0
    %1714 = vmatprep.subr.mxu0 0.0
    %1715 = vmatpush1.xpose.msra.mxu0 0.0
    %1716 = vmatprep.subr.mxu0 0.0
    %1717 = vmatpush1.xpose.msra.mxu0 0.0
    %1718 = vmatprep.subr.mxu0 0.0
    %1719 = vmatpush1.xpose.msra.mxu0 0.0
    %1720 = vmatprep.subr.mxu0 0.0
    %1721 = vmatpush1.xpose.msra.mxu0 0.0
    %1722 = vmatprep.subr.mxu0 0.0
    %1723 = vmatpush1.xpose.msra.mxu0 0.0
    %1724 = vmatprep.subr.mxu0 0.0
    %1725 = vmatpush1.xpose.msra.mxu0 0.0
    %1726 = vmatprep.subr.mxu0 0.0
    %1727 = vmatpush1.xpose.msra.mxu0 0.0
    %1728 = vmatprep.subr.mxu0 0.0
    %1729 = vmatpush1.xpose.msra.mxu0 0.0
    %1730 = vmatprep.subr.mxu0 0.0
    %1731 = vmatpush1.xpose.msra.mxu0 0.0
    %1732 = vmatprep.subr.mxu0 0.0
    %1733 = vmatpush1.xpose.msra.mxu0 0.0
    %1734 = vmatprep.subr.mxu0 0.0
    %1735 = vmatpush1.xpose.msra.mxu0 0.0
    %1736 = vmatprep.subr.mxu0 0.0
    %1737 = vmatpush1.xpose.msra.mxu0 0.0
    %1738 = vmatprep.subr.mxu0 0.0
    %1739 = vmatpush1.xpose.msra.mxu0 0.0
    %1740 = vmatprep.subr.mxu0 0.0
    %1741 = vmatpush1.xpose.msra.mxu0 0.0
    %1742 = vmatprep.subr.mxu0 0.0
    %1743 = vmatpush1.xpose.msra.mxu0 0.0
    %1744 = vmatprep.subr.mxu0 0.0
    %1745 = vmatpush1.xpose.msra.mxu0 0.0
    %1746 = vmatprep.subr.mxu0 0.0
    %1747 = vmatpush1.xpose.msra.mxu0 0.0
    %1748 = vmatprep.subr.mxu0 0.0
    %1749 = vmatpush1.xpose.msra.mxu0 0.0
    %1750 = vmatprep.subr.mxu0 0.0
    %1751 = vmatpush1.xpose.msra.mxu0 0.0
    %1752 = vmatprep.subr.mxu0 0.0
    %1753 = vmatpush1.xpose.msra.mxu0 0.0
    %1754 = vmatprep.subr.mxu0 0.0
    %1755 = vmatpush1.xpose.msra.mxu0 0.0
    %1756 = vmatprep.subr.mxu0 0.0
    %1757 = vmatpush1.xpose.msra.mxu0 0.0
    %1758 = vmatprep.subr.mxu0 0.0
    %1759 = vmatpush1.xpose.msra.mxu0 0.0
    %1760 = vmatprep.subr.mxu0 0.0
    %1761 = vmatpush1.xpose.msra.mxu0 0.0
    %1762 = vmatprep.subr.mxu0 0.0
    %1763 = vmatpush1.xpose.msra.mxu0 0.0
    %1764 = vmatprep.subr.mxu0 0.0
    %1765 = vmatpush1.xpose.msra.mxu0 0.0
    %1766 = vmatprep.subr.mxu0 0.0
    %1767 = vmatpush1.xpose.msra.mxu0 0.0
    %1768 = vmatprep.subr.mxu0 0.0
    %1769 = vmatpush1.xpose.msra.mxu0 0.0
    %1770 = vmatprep.mubr.f32.mxu0 0.0
    %1771 = vmatmul.mubr.f32.gmra.mrb[0].mxu0 %v1698
    %v1772 = vpop.f32.mrb[0].mxu0
    %v1773 = vadd.f32 0.0, %v1772
    %v1774 = vpop.f32.mrb[0].mxu0
    %1775 = vmatprep.mubr.f32.mxu0 0.0
    %1776 = vmatmul.mubr.f32.gmra.mrb[0].mxu0 %v1700
    %v1777 = vpop.f32.mrb[0].mxu0
    %v1778 = vadd.f32 0.0, %v1777
    %v1779 = vpop.f32.mrb[0].mxu0
    %1780 = vdwg.mxu0
    %v1781 = vsel %vm486, %v1773, -inf
    %1782 = vmax.xlane.f32.xlu0 %v1781
    %v1783 = vpop.xlane.xlu0 %1782
    %v1784 = vsel %vm486, %v1778, -inf
    %1785 = vmax.xlane.f32.xlu0 %v1784
    %v1786 = vpop.xlane.xlu0 %1785
    %v1787 = vsub.f32 %v1773, %v1783
    %v1788 = vsub.f32 %v1778, %v1786
    %v1789 = vmul.f32 %v1787, 1.442695
    %v1790 = vpow.pop %v1789
    %v1791 = vmul.f32 %v1788, 1.442695
    %v1792 = vpow.pop %v1791
    %v1793 = vsel %vm486, %v1790, 0.0
    %1794 = vadd.xlane.f32.xlu0 %v1793
    %v1795 = vpop.xlane.xlu0 %1794
    %v1796 = vsel %vm486, %v1792, 0.0
    %1797 = vadd.xlane.f32.xlu0 %v1796
    %v1798 = vpop.xlane.xlu0 %1797
    %1801 = vrot.lane.b32.xlu0 %v1684, 104
    %v1802 = vpop.permute.xlu0 %1801
    %1803 = vrot.lane.b32.xlu0 %v1685, 104
    %v1804 = vpop.permute.xlu0 %1803
    %v1808 = vsel %vm486, %v1790, 0
    %v1811 = vsel %vm486, %v1792, 0
    %1813 = vmatprep.subr.mxu0 0.0
    %1814 = vmatpush1.msra.mxu0 %v1802
    %1815 = vmatprep.subr.mxu0 0.0
    %1816 = vmatpush1.msra.mxu0 %v1804
    %1817 = vmatprep.subr.mxu0 0.0
    %1818 = vmatpush1.msra.mxu0 0.0
    %1819 = vmatprep.subr.mxu0 0.0
    %1820 = vmatpush1.msra.mxu0 0.0
    %1821 = vmatprep.subr.mxu0 0.0
    %1822 = vmatpush1.msra.mxu0 0.0
    %1823 = vmatprep.subr.mxu0 0.0
    %1824 = vmatpush1.msra.mxu0 0.0
    %1825 = vmatprep.subr.mxu0 0.0
    %1826 = vmatpush1.msra.mxu0 0.0
    %1827 = vmatprep.subr.mxu0 0.0
    %1828 = vmatpush1.msra.mxu0 0.0
    %1829 = vmatprep.subr.mxu0 0.0
    %1830 = vmatpush1.msra.mxu0 0.0
    %1831 = vmatprep.subr.mxu0 0.0
    %1832 = vmatpush1.msra.mxu0 0.0
    %1833 = vmatprep.subr.mxu0 0.0
    %1834 = vmatpush1.msra.mxu0 0.0
    %1835 = vmatprep.subr.mxu0 0.0
    %1836 = vmatpush1.msra.mxu0 0.0
    %1837 = vmatprep.subr.mxu0 0.0
    %1838 = vmatpush1.msra.mxu0 0.0
    %1839 = vmatprep.subr.mxu0 0.0
    %1840 = vmatpush1.msra.mxu0 0.0
    %1841 = vmatprep.subr.mxu0 0.0
    %1842 = vmatpush1.msra.mxu0 0.0
    %1843 = vmatprep.subr.mxu0 0.0
    %1844 = vmatpush1.msra.mxu0 0.0
    %1845 = vmatprep.subr.mxu0 0.0
    %1846 = vmatpush1.msra.mxu0 0.0
    %1847 = vmatprep.subr.mxu0 0.0
    %1848 = vmatpush1.msra.mxu0 0.0
    %1849 = vmatprep.subr.mxu0 0.0
    %1850 = vmatpush1.msra.mxu0 0.0
    %1851 = vmatprep.subr.mxu0 0.0
    %1852 = vmatpush1.msra.mxu0 0.0
    %1853 = vmatprep.subr.mxu0 0.0
    %1854 = vmatpush1.msra.mxu0 0.0
    %1855 = vmatprep.subr.mxu0 0.0
    %1856 = vmatpush1.msra.mxu0 0.0
    %1857 = vmatprep.subr.mxu0 0.0
    %1858 = vmatpush1.msra.mxu0 0.0
    %1859 = vmatprep.subr.mxu0 0.0
    %1860 = vmatpush1.msra.mxu0 0.0
    %1861 = vmatprep.subr.mxu0 0.0
    %1862 = vmatpush1.msra.mxu0 0.0
    %1863 = vmatprep.subr.mxu0 0.0
    %1864 = vmatpush1.msra.mxu0 0.0
    %1865 = vmatprep.subr.mxu0 0.0
    %1866 = vmatpush1.msra.mxu0 0.0
    %1867 = vmatprep.subr.mxu0 0.0
    %1868 = vmatpush1.msra.mxu0 0.0
    %1869 = vmatprep.subr.mxu0 0.0
    %1870 = vmatpush1.msra.mxu0 0.0
    %1871 = vmatprep.subr.mxu0 0.0
    %1872 = vmatpush1.msra.mxu0 0.0
    %1873 = vmatprep.subr.mxu0 0.0
    %1874 = vmatpush1.msra.mxu0 0.0
    %1875 = vmatprep.subr.mxu0 0.0
    %1876 = vmatpush1.msra.mxu0 0.0
    %1877 = vmatprep.mubr.f32.mxu0 0.0
    %1878 = vmatmul.mubr.f32.gmra.mrb[0].mxu0 %v1808
    %v1879 = vpop.f32.mrb[0].mxu0
    %v1880 = vadd.f32 0.0, %v1879
    %v1881 = vpop.f32.mrb[0].mxu0
    %1882 = vmatprep.mubr.f32.mxu0 0.0
    %1883 = vmatmul.mubr.f32.gmra.mrb[0].mxu0 %v1811
    %v1884 = vpop.f32.mrb[0].mxu0
    %v1885 = vadd.f32 0.0, %v1884
    %v1886 = vpop.f32.mrb[0].mxu0
    %1887 = vdwg.mxu0
    %v1888 = vrcp.pop %v1795
    %v1889 = vrcp.pop %v1798
    %v1890 = vmul.f32 %v1880, %v1888
    %v1891 = vmul.f32 %v1885, %v1889
    %1894 = vrot.lane.b32.xlu0 %v1890, 24
    %v1895 = vpop.permute.xlu0 %1894
    %1896 = vrot.lane.b32.xlu0 %v1891, 24
    %v1897 = vpop.permute.xlu0 %1896
    %vm1900 = vcmask 261312
    %1901 = vst.msk [vmem:[#allocation5] sm:$0xff] %vm1900, %v1895
    %1902 = vst.msk [vmem:[#allocation5 + $0x8] sm:$0xff] %vm1900, %v1897
    %v1903 = vld [vmem:[#allocation2 + $0x10] sm:$0xff]
    %v1904 = vld [vmem:[#allocation2 + $0x18] sm:$0xff]
    %v1905 = vld [vmem:[#allocation3 + $0x10] sm:$0xff]
    %v1906 = vld [vmem:[#allocation3 + $0x18] sm:$0xff]
    %v1907 = vld [vmem:[#allocation4 + $0x10] sm:$0xff]
    %v1908 = vld [vmem:[#allocation4 + $0x18] sm:$0xff]
    %1911 = vrot.lane.b32.xlu0 %v1903, 104
    %v1912 = vpop.permute.xlu0 %1911
    %1913 = vrot.lane.b32.xlu0 %v1904, 104
    %v1914 = vpop.permute.xlu0 %1913
    %1917 = vrot.lane.b32.xlu0 %v1905, 104
    %v1918 = vpop.permute.xlu0 %1917
    %1919 = vrot.lane.b32.xlu0 %v1906, 104
    %v1920 = vpop.permute.xlu0 %1919
    %v1921 = vsel %vm398, %v1912, 0
    %v1923 = vsel %vm398, %v1914, 0
    %v1925 = vsel %vm398, %v1918, 0
    %v1927 = vsel %vm398, %v1920, 0
    %1929 = vmatprep.subr.mxu0 0.0
    %1930 = vmatpush1.xpose.msra.mxu0 %v1925
    %1931 = vmatprep.subr.mxu0 0.0
    %1932 = vmatpush1.xpose.msra.mxu0 %v1927
    %1933 = vmatprep.subr.mxu0 0.0
    %1934 = vmatpush1.xpose.msra.mxu0 0.0
    %1935 = vmatprep.subr.mxu0 0.0
    %1936 = vmatpush1.xpose.msra.mxu0 0.0
    %1937 = vmatprep.subr.mxu0 0.0
    %1938 = vmatpush1.xpose.msra.mxu0 0.0
    %1939 = vmatprep.subr.mxu0 0.0
    %1940 = vmatpush1.xpose.msra.mxu0 0.0
    %1941 = vmatprep.subr.mxu0 0.0
    %1942 = vmatpush1.xpose.msra.mxu0 0.0
    %1943 = vmatprep.subr.mxu0 0.0
    %1944 = vmatpush1.xpose.msra.mxu0 0.0
    %1945 = vmatprep.subr.mxu0 0.0
    %1946 = vmatpush1.xpose.msra.mxu0 0.0
    %1947 = vmatprep.subr.mxu0 0.0
    %1948 = vmatpush1.xpose.msra.mxu0 0.0
    %1949 = vmatprep.subr.mxu0 0.0
    %1950 = vmatpush1.xpose.msra.mxu0 0.0
    %1951 = vmatprep.subr.mxu0 0.0
    %1952 = vmatpush1.xpose.msra.mxu0 0.0
    %1953 = vmatprep.subr.mxu0 0.0
    %1954 = vmatpush1.xpose.msra.mxu0 0.0
    %1955 = vmatprep.subr.mxu0 0.0
    %1956 = vmatpush1.xpose.msra.mxu0 0.0
    %1957 = vmatprep.subr.mxu0 0.0
    %1958 = vmatpush1.xpose.msra.mxu0 0.0
    %1959 = vmatprep.subr.mxu0 0.0
    %1960 = vmatpush1.xpose.msra.mxu0 0.0
    %1961 = vmatprep.subr.mxu0 0.0
    %1962 = vmatpush1.xpose.msra.mxu0 0.0
    %1963 = vmatprep.subr.mxu0 0.0
    %1964 = vmatpush1.xpose.msra.mxu0 0.0
    %1965 = vmatprep.subr.mxu0 0.0
    %1966 = vmatpush1.xpose.msra.mxu0 0.0
    %1967 = vmatprep.subr.mxu0 0.0
    %1968 = vmatpush1.xpose.msra.mxu0 0.0
    %1969 = vmatprep.subr.mxu0 0.0
    %1970 = vmatpush1.xpose.msra.mxu0 0.0
    %1971 = vmatprep.subr.mxu0 0.0
    %1972 = vmatpush1.xpose.msra.mxu0 0.0
    %1973 = vmatprep.subr.mxu0 0.0
    %1974 = vmatpush1.xpose.msra.mxu0 0.0
    %1975 = vmatprep.subr.mxu0 0.0
    %1976 = vmatpush1.xpose.msra.mxu0 0.0
    %1977 = vmatprep.subr.mxu0 0.0
    %1978 = vmatpush1.xpose.msra.mxu0 0.0
    %1979 = vmatprep.subr.mxu0 0.0
    %1980 = vmatpush1.xpose.msra.mxu0 0.0
    %1981 = vmatprep.subr.mxu0 0.0
    %1982 = vmatpush1.xpose.msra.mxu0 0.0
    %1983 = vmatprep.subr.mxu0 0.0
    %1984 = vmatpush1.xpose.msra.mxu0 0.0
    %1985 = vmatprep.subr.mxu0 0.0
    %1986 = vmatpush1.xpose.msra.mxu0 0.0
    %1987 = vmatprep.subr.mxu0 0.0
    %1988 = vmatpush1.xpose.msra.mxu0 0.0
    %1989 = vmatprep.subr.mxu0 0.0
    %1990 = vmatpush1.xpose.msra.mxu0 0.0
    %1991 = vmatprep.subr.mxu0 0.0
    %1992 = vmatpush1.xpose.msra.mxu0 0.0
    %1993 = vmatprep.mubr.f32.mxu0 0.0
    %1994 = vmatmul.mubr.f32.gmra.mrb[0].mxu0 %v1921
    %v1995 = vpop.f32.mrb[0].mxu0
    %v1996 = vadd.f32 0.0, %v1995
    %v1997 = vpop.f32.mrb[0].mxu0
    %1998 = vmatprep.mubr.f32.mxu0 0.0
    %1999 = vmatmul.mubr.f32.gmra.mrb[0].mxu0 %v1923
    %v2000 = vpop.f32.mrb[0].mxu0
    %v2001 = vadd.f32 0.0, %v2000
    %v2002 = vpop.f32.mrb[0].mxu0
    %2003 = vdwg.mxu0
    %v2004 = vsel %vm486, %v1996, -inf
    %2005 = vmax.xlane.f32.xlu0 %v2004
    %v2006 = vpop.xlane.xlu0 %2005
    %v2007 = vsel %vm486, %v2001, -inf
    %2008 = vmax.xlane.f32.xlu0 %v2007
    %v2009 = vpop.xlane.xlu0 %2008
    %v2010 = vsub.f32 %v1996, %v2006
    %v2011 = vsub.f32 %v2001, %v2009
    %v2012 = vmul.f32 %v2010, 1.442695
    %v2013 = vpow.pop %v2012
    %v2014 = vmul.f32 %v2011, 1.442695
    %v2015 = vpow.pop %v2014
    %v2016 = vsel %vm486, %v2013, 0.0
    %2017 = vadd.xlane.f32.xlu0 %v2016
    %v2018 = vpop.xlane.xlu0 %2017
    %v2019 = vsel %vm486, %v2015, 0.0
    %2020 = vadd.xlane.f32.xlu0 %v2019
    %v2021 = vpop.xlane.xlu0 %2020
    %2024 = vrot.lane.b32.xlu0 %v1907, 104
    %v2025 = vpop.permute.xlu0 %2024
    %2026 = vrot.lane.b32.xlu0 %v1908, 104
    %v2027 = vpop.permute.xlu0 %2026
    %v2031 = vsel %vm486, %v2013, 0
    %v2034 = vsel %vm486, %v2015, 0
    %2036 = vmatprep.subr.mxu0 0.0
    %2037 = vmatpush1.msra.mxu0 %v2025
    %2038 = vmatprep.subr.mxu0 0.0
    %2039 = vmatpush1.msra.mxu0 %v2027
    %2040 = vmatprep.subr.mxu0 0.0
    %2041 = vmatpush1.msra.mxu0 0.0
    %2042 = vmatprep.subr.mxu0 0.0
    %2043 = vmatpush1.msra.mxu0 0.0
    %2044 = vmatprep.subr.mxu0 0.0
    %2045 = vmatpush1.msra.mxu0 0.0
    %2046 = vmatprep.subr.mxu0 0.0
    %2047 = vmatpush1.msra.mxu0 0.0
    %2048 = vmatprep.subr.mxu0 0.0
    %2049 = vmatpush1.msra.mxu0 0.0
    %2050 = vmatprep.subr.mxu0 0.0
    %2051 = vmatpush1.msra.mxu0 0.0
    %2052 = vmatprep.subr.mxu0 0.0
    %2053 = vmatpush1.msra.mxu0 0.0
    %2054 = vmatprep.subr.mxu0 0.0
    %2055 = vmatpush1.msra.mxu0 0.0
    %2056 = vmatprep.subr.mxu0 0.0
    %2057 = vmatpush1.msra.mxu0 0.0
    %2058 = vmatprep.subr.mxu0 0.0
    %2059 = vmatpush1.msra.mxu0 0.0
    %2060 = vmatprep.subr.mxu0 0.0
    %2061 = vmatpush1.msra.mxu0 0.0
    %2062 = vmatprep.subr.mxu0 0.0
    %2063 = vmatpush1.msra.mxu0 0.0
    %2064 = vmatprep.subr.mxu0 0.0
    %2065 = vmatpush1.msra.mxu0 0.0
    %2066 = vmatprep.subr.mxu0 0.0
    %2067 = vmatpush1.msra.mxu0 0.0
    %2068 = vmatprep.subr.mxu0 0.0
    %2069 = vmatpush1.msra.mxu0 0.0
    %2070 = vmatprep.subr.mxu0 0.0
    %2071 = vmatpush1.msra.mxu0 0.0
    %2072 = vmatprep.subr.mxu0 0.0
    %2073 = vmatpush1.msra.mxu0 0.0
    %2074 = vmatprep.subr.mxu0 0.0
    %2075 = vmatpush1.msra.mxu0 0.0
    %2076 = vmatprep.subr.mxu0 0.0
    %2077 = vmatpush1.msra.mxu0 0.0
    %2078 = vmatprep.subr.mxu0 0.0
    %2079 = vmatpush1.msra.mxu0 0.0
    %2080 = vmatprep.subr.mxu0 0.0
    %2081 = vmatpush1.msra.mxu0 0.0
    %2082 = vmatprep.subr.mxu0 0.0
    %2083 = vmatpush1.msra.mxu0 0.0
    %2084 = vmatprep.subr.mxu0 0.0
    %2085 = vmatpush1.msra.mxu0 0.0
    %2086 = vmatprep.subr.mxu0 0.0
    %2087 = vmatpush1.msra.mxu0 0.0
    %2088 = vmatprep.subr.mxu0 0.0
    %2089 = vmatpush1.msra.mxu0 0.0
    %2090 = vmatprep.subr.mxu0 0.0
    %2091 = vmatpush1.msra.mxu0 0.0
    %2092 = vmatprep.subr.mxu0 0.0
    %2093 = vmatpush1.msra.mxu0 0.0
    %2094 = vmatprep.subr.mxu0 0.0
    %2095 = vmatpush1.msra.mxu0 0.0
    %2096 = vmatprep.subr.mxu0 0.0
    %2097 = vmatpush1.msra.mxu0 0.0
    %2098 = vmatprep.subr.mxu0 0.0
    %2099 = vmatpush1.msra.mxu0 0.0
    %2100 = vmatprep.mubr.f32.mxu0 0.0
    %2101 = vmatmul.mubr.f32.gmra.mrb[0].mxu0 %v2031
    %v2102 = vpop.f32.mrb[0].mxu0
    %v2103 = vadd.f32 0.0, %v2102
    %v2104 = vpop.f32.mrb[0].mxu0
    %2105 = vmatprep.mubr.f32.mxu0 0.0
    %2106 = vmatmul.mubr.f32.gmra.mrb[0].mxu0 %v2034
    %v2107 = vpop.f32.mrb[0].mxu0
    %v2108 = vadd.f32 0.0, %v2107
    %v2109 = vpop.f32.mrb[0].mxu0
    %2110 = vdwg.mxu0
    %v2111 = vrcp.pop %v2018
    %v2112 = vrcp.pop %v2021
    %v2113 = vmul.f32 %v2103, %v2111
    %v2114 = vmul.f32 %v2108, %v2112
    %2117 = vrot.lane.b32.xlu0 %v2113, 24
    %v2118 = vpop.permute.xlu0 %2117
    %2119 = vrot.lane.b32.xlu0 %v2114, 24
    %v2120 = vpop.permute.xlu0 %2119
    %2123 = vst.msk [vmem:[#allocation5 + $0x10] sm:$0xff] %vm1900, %v2118
    %2124 = vst.msk [vmem:[#allocation5 + $0x18] sm:$0xff] %vm1900, %v2120
    %v2125 = vld [vmem:[#allocation5] sm:$0xff]
    %v2126 = vld [vmem:[#allocation5 + $0x8] sm:$0xff]
    %v2127 = vld [vmem:[#allocation5 + $0x10] sm:$0xff]
    %v2128 = vld [vmem:[#allocation5 + $0x18] sm:$0xff]
    %v2129 = vld [vmem:[#allocation14] sm:$0xff]
    %v2130 = vld [vmem:[#allocation14 + $0x8] sm:$0xff]
    %v2131 = vld [vmem:[#allocation14 + $0x10] sm:$0xff]
    %v2132 = vld [vmem:[#allocation14 + $0x18] sm:$0xff]
    %v2133 = vld [vmem:[%s5] sm:$0x1]
    %v2135 = vlaneseq
    %v2136 = vshrl.u32 %v2135, 7
    %v2137 = vsub.s32 0, %v2136
    %v2138 = vrot.slane %v2133, %v2137
    %v2141 = vsel %vm100, %v2125, 0
    %v2144 = vsel %vm100, %v2126, 0
    %v2147 = vsel %vm100, %v2127, 0
    %v2150 = vsel %vm100, %v2128, 0
    %2152 = vmatprep.subr.mxu0 0.0
    %2153 = vmatpush1.msra.mxu0 %v2129
    %2154 = vmatprep.subr.mxu0 0.0
    %2155 = vmatpush1.msra.mxu0 %v2130
    %2156 = vmatprep.subr.mxu0 0.0
    %2157 = vmatpush1.msra.mxu0 %v2131
    %2158 = vmatprep.subr.mxu0 0.0
    %2159 = vmatpush1.msra.mxu0 %v2132
    %2160 = vmatprep.subr.mxu0 0.0
    %2161 = vmatpush1.msra.mxu0 0.0
    %2162 = vmatprep.subr.mxu0 0.0
    %2163 = vmatpush1.msra.mxu0 0.0
    %2164 = vmatprep.subr.mxu0 0.0
    %2165 = vmatpush1.msra.mxu0 0.0
    %2166 = vmatprep.subr.mxu0 0.0
    %2167 = vmatpush1.msra.mxu0 0.0
    %2168 = vmatprep.subr.mxu0 0.0
    %2169 = vmatpush1.msra.mxu0 0.0
    %2170 = vmatprep.subr.mxu0 0.0
    %2171 = vmatpush1.msra.mxu0 0.0
    %2172 = vmatprep.subr.mxu0 0.0
    %2173 = vmatpush1.msra.mxu0 0.0
    %2174 = vmatprep.subr.mxu0 0.0
    %2175 = vmatpush1.msra.mxu0 0.0
    %2176 = vmatprep.subr.mxu0 0.0
    %2177 = vmatpush1.msra.mxu0 0.0
    %2178 = vmatprep.subr.mxu0 0.0
    %2179 = vmatpush1.msra.mxu0 0.0
    %2180 = vmatprep.subr.mxu0 0.0
    %2181 = vmatpush1.msra.mxu0 0.0
    %2182 = vmatprep.subr.mxu0 0.0
    %2183 = vmatpush1.msra.mxu0 0.0
    %2184 = vmatprep.subr.mxu0 0.0
    %2185 = vmatpush1.msra.mxu0 0.0
    %2186 = vmatprep.subr.mxu0 0.0
    %2187 = vmatpush1.msra.mxu0 0.0
    %2188 = vmatprep.subr.mxu0 0.0
    %2189 = vmatpush1.msra.mxu0 0.0
    %2190 = vmatprep.subr.mxu0 0.0
    %2191 = vmatpush1.msra.mxu0 0.0
    %2192 = vmatprep.subr.mxu0 0.0
    %2193 = vmatpush1.msra.mxu0 0.0
    %2194 = vmatprep.subr.mxu0 0.0
    %2195 = vmatpush1.msra.mxu0 0.0
    %2196 = vmatprep.subr.mxu0 0.0
    %2197 = vmatpush1.msra.mxu0 0.0
    %2198 = vmatprep.subr.mxu0 0.0
    %2199 = vmatpush1.msra.mxu0 0.0
    %2200 = vmatprep.subr.mxu0 0.0
    %2201 = vmatpush1.msra.mxu0 0.0
    %2202 = vmatprep.subr.mxu0 0.0
    %2203 = vmatpush1.msra.mxu0 0.0
    %2204 = vmatprep.subr.mxu0 0.0
    %2205 = vmatpush1.msra.mxu0 0.0
    %2206 = vmatprep.subr.mxu0 0.0
    %2207 = vmatpush1.msra.mxu0 0.0
    %2208 = vmatprep.subr.mxu0 0.0
    %2209 = vmatpush1.msra.mxu0 0.0
    %2210 = vmatprep.subr.mxu0 0.0
    %2211 = vmatpush1.msra.mxu0 0.0
    %2212 = vmatprep.subr.mxu0 0.0
    %2213 = vmatpush1.msra.mxu0 0.0
    %2214 = vmatprep.subr.mxu0 0.0
    %2215 = vmatpush1.msra.mxu0 0.0
    %2216 = vmatprep.mubr.f32.mxu0 0.0
    %2217 = vmatmul.mubr.f32.gmra.mrb[0].mxu0 %v2141
    %v2218 = vpop.f32.mrb[0].mxu0
    %v2219 = vadd.f32 %v2138, %v2218
    %v2220 = vpop.f32.mrb[0].mxu0
    %2221 = vmatprep.mubr.f32.mxu0 0.0
    %2222 = vmatmul.mubr.f32.gmra.mrb[0].mxu0 %v2144
    %v2223 = vpop.f32.mrb[0].mxu0
    %v2224 = vadd.f32 %v2138, %v2223
    %v2225 = vpop.f32.mrb[0].mxu0
    %2226 = vmatprep.mubr.f32.mxu0 0.0
    %2227 = vmatmul.mubr.f32.gmra.mrb[0].mxu0 %v2147
    %v2228 = vpop.f32.mrb[0].mxu0
    %v2229 = vadd.f32 %v2138, %v2228
    %v2230 = vpop.f32.mrb[0].mxu0
    %2231 = vmatprep.mubr.f32.mxu0 0.0
    %2232 = vmatmul.mubr.f32.gmra.mrb[0].mxu0 %v2150
    %v2233 = vpop.f32.mrb[0].mxu0
    %v2234 = vadd.f32 %v2138, %v2233
    %v2235 = vpop.f32.mrb[0].mxu0
    %2236 = vdwg.mxu0
    %2237 = vst.msk [vmem:[#allocation15] sm:$0xff] %vm100, %v2219
    %2238 = vst.msk [vmem:[#allocation15 + $0x8] sm:$0xff] %vm100, %v2224
    %2239 = vst.msk [vmem:[#allocation15 + $0x10] sm:$0xff] %vm100, %v2229
    %2240 = vst.msk [vmem:[#allocation15 + $0x18] sm:$0xff] %vm100, %v2234
    // Predicated region
    $region46: #{tpu_custom_call.1} parent=1 // pred_check
      _
    $region47: #{tpu_custom_call.1} parent=1 // pred_check_branch
      %2242 = sbr.rel (0) target = $region49
    $region48: #{tpu_custom_call.1} parent=1 // pred_region
      %s2244 = ssub.s32 512, 512
      %2245 = vsyncadd [#allocation8], %s2244
      %s2246 = sshll.u32 [#allocation15], 4
      %s2247 = int_to_ptr.vmem [resolvable:$true] %s2246
      %2252 = dma.vmem_to_hbm [thread:$0]  %s2247, 512, %s6, [#allocation8], 128, 128, 8
    $region49: #{tpu_custom_call.1} parent=1 // pred_fallthru
      _
    // Predicated region
    $region50: #{tpu_custom_call.1} parent=1 // pred_check
      _
    $region51: #{tpu_custom_call.1} parent=1 // pred_check_branch
      %2254 = sbr.rel (0) target = $region53
    $region52: #{tpu_custom_call.1} parent=1 // pred_region
      %2255 = dma.done [#allocation8], 512
    $region53: #{tpu_custom_call.1} parent=1 // pred_fallthru
      _
    %2256 = vsyncpa [#allocation7], 1
    %2257 = vsyncpa [#allocation10], 1
    %2258 = vsyncpa [#allocation13], 1
    %2259 = vsyncpa [#allocation8], 1

</llo_original>
